<compile_context>
chip_gen: v5e
topology: v5e:2x2
jax: 0.10.0
libtpu: 0.0.40
codegen_flags: <defaults>
</compile_context>

<pallas_src>
import jax
import jax.numpy as jnp
from jax.experimental import pallas as pl
from jax.experimental.pallas import tpu as pltpu

FC1_DIMS = 1024
FC2_DIMS = 512


def _round_up(n, m):
    return ((n + m - 1) // m) * m


def _device_kind():
    try:
        return jax.devices()[0].device_kind.lower()
    except Exception:
        return ""


def _default_l3_on_mxu():
    # v6e/v7x: MXU has slack, the serial XLU reduce is a visible tail -> MXU epilogue.
    # v5e (and older / unknown): MXU is the binding unit -> keep VPU/XLU epilogue.
    kind = _device_kind()
    return any(tag in kind for tag in ("v6", "v7", "7x"))


def _critic_kernel_vpu_l3(x_ref, w1_ref, b1_ref, w2_ref, b2_ref, w3_ref, b3_ref, o_ref):
    # Layer 1: in-kernel bf16 cast of the x tile; MXU matmul, f32 accumulate;
    # bias + ReLU + bf16 downcast fused so h1 is materialized once in bf16.
    xb = x_ref[...].astype(jnp.bfloat16)
    h1 = jnp.dot(xb, w1_ref[...], preferred_element_type=jnp.float32)
    h1 = jnp.maximum(h1 + b1_ref[...], 0.0).astype(jnp.bfloat16)
    # Layer 2 (carries ~99% of the FLOPs).
    h2 = jnp.dot(h1, w2_ref[...], preferred_element_type=jnp.float32)
    h2 = jnp.maximum(h2 + b2_ref[...], 0.0)
    # Layer 3 (512 -> 1): VPU multiply, pre-reduce 512 -> 128 lanes with free
    # static 128-lane slices (VPU adds, no relayout), then a single 128-lane
    # XLU reduce per vreg. b3 is a scalar in SMEM.
    p = h2 * w3_ref[...].astype(jnp.float32)                 # (tb, 512)
    q = p[:, 0:128]
    for c in range(1, FC2_DIMS // 128):
        q = q + p[:, c * 128:(c + 1) * 128]
    out = jnp.sum(q, axis=-1, keepdims=True) + b3_ref[0, 0]
    o_ref[...] = out.astype(o_ref.dtype)


def _critic_kernel_mxu_l3(x_ref, w1_ref, b1_ref, w2_ref, b2_ref, w3p_ref, b3_ref, o_ref):
    xb = x_ref[...].astype(jnp.bfloat16)
    h1 = jnp.dot(xb, w1_ref[...], preferred_element_type=jnp.float32)
    h1 = jnp.maximum(h1 + b1_ref[...], 0.0).astype(jnp.bfloat16)
    h2 = jnp.dot(h1, w2_ref[...], preferred_element_type=jnp.float32)
    h2 = jnp.maximum(h2 + b2_ref[...], 0.0).astype(jnp.bfloat16)
    # Layer 3 on the MXU: w3 zero-padded to (512, 128), only lane 0 is real.
    h3 = jnp.dot(h2, w3p_ref[...], preferred_element_type=jnp.float32)   # (tb, 128)
    o_ref[...] = (h3[:, 0:1] + b3_ref[0, 0]).astype(o_ref.dtype)


def critic_forward(x, params, *, batch_tile=1024, parallel_batch=None, l3_on_mxu=None):
    """x: (B, state_shape) f32 -> value: (B, 1) f32.

    bf16 MXU operands with f32 accumulation (intentional precision choice for
    an RL value head; reference below uses the same math).
    """
    w1, b1, w2, b2, w3, b3 = params
    B, S = x.shape

    if l3_on_mxu is None:
        l3_on_mxu = _default_l3_on_mxu()

    # Balanced batch tiling: spread B evenly over cdiv(B, batch_tile) tiles,
    # round the tile to a multiple of 16 (bf16 sublane packing), and clamp to
    # B (a block equal to the full dim is always legal). The last block may be
    # ragged; Pallas clips the DMA and masks the stores, so the returned
    # (B, 1) buffer contains no padded rows.
    n_tiles = pl.cdiv(B, batch_tile)
    tb = min(_round_up(pl.cdiv(B, n_tiles), 16), B)
    grid = (pl.cdiv(B, tb),)

    if parallel_batch is None:
        # Megacore-shard the batch whenever there is more than one tile
        # (2x on v7x dual-TC; no-op on single-TC v5e/v6e).
        parallel_batch = grid[0] > 1

    const = lambda i: (0, 0)  # same block every step -> weights stay VMEM-resident

    if l3_on_mxu:
        kernel = _critic_kernel_mxu_l3
        w3_arg = jnp.zeros((FC2_DIMS, 128), jnp.bfloat16).at[:, 0].set(w3[0])
        w3_spec = pl.BlockSpec((FC2_DIMS, 128), const)
        l3_flops = 2 * B * FC2_DIMS * 128
    else:
        kernel = _critic_kernel_vpu_l3
        w3_arg = w3
        w3_spec = pl.BlockSpec((1, FC2_DIMS), const)
        l3_flops = 2 * B * FC2_DIMS

    flops = 2 * B * (S * FC1_DIMS + FC1_DIMS * FC2_DIMS) + l3_flops
    bytes_accessed = (
        x.size * 4 + w1.size * 2 + w2.size * 2 + w3_arg.size * 2
        + b1.size * 4 + b2.size * 4 + b3.size * 4 + B * 4
    )

    out = pl.pallas_call(
        kernel,
        out_shape=jax.ShapeDtypeStruct((B, 1), jnp.float32),
        grid=grid,
        in_specs=[
            pl.BlockSpec((tb, S), lambda i: (i, 0)),          # x : streamed per tile (f32)
            pl.BlockSpec((S, FC1_DIMS), const),               # w1: resident (bf16)
            pl.BlockSpec((1, FC1_DIMS), const),               # b1: resident (f32)
            pl.BlockSpec((FC1_DIMS, FC2_DIMS), const),        # w2: resident (bf16)
            pl.BlockSpec((1, FC2_DIMS), const),               # b2: resident (f32)
            w3_spec,                                          # w3 row / padded w3
            pl.BlockSpec(memory_space=pltpu.SMEM),            # b3 scalar in SMEM
        ],
        # (tb, 1) output is ~1 KiB/tile; lane-dense restructuring not worth it here.
        out_specs=pl.BlockSpec((tb, 1), lambda i: (i, 0)),
        compiler_params=pltpu.CompilerParams(
            dimension_semantics=("parallel" if parallel_batch else "arbitrary",),
            vmem_limit_bytes=32 * 1024 * 1024,
        ),
        cost_estimate=pl.CostEstimate(
            flops=flops, transcendentals=0, bytes_accessed=bytes_accessed),
    )(x, w1, b1, w2, b2, w3_arg, b3)

    return out


def init_critic_params(key, state_shape):
    """Init mirroring nn.Linear default (uniform +/- 1/sqrt(fan_in))."""
    def linear_init(k, fan_in, fan_out):
        kw, kb = jax.random.split(k)
        bound = 1.0 / jnp.sqrt(fan_in)
        w = jax.random.uniform(kw, (fan_in, fan_out), jnp.float32, -bound, bound)
        b = jax.random.uniform(kb, (1, fan_out), jnp.float32, -bound, bound)
        return w, b

    k1, k2, k3 = jax.random.split(key, 3)
    w1, b1 = linear_init(k1, state_shape, FC1_DIMS)
    w2, b2 = linear_init(k2, FC1_DIMS, FC2_DIMS)
    w3, b3 = linear_init(k3, FC2_DIMS, 1)
    # Weights stored bf16 (MXU-native, half the DMA); biases stay f32.
    # w3 stored as a (1, 512) row; padded to (512, 128) on the fly for the MXU epilogue.
    return (w1.astype(jnp.bfloat16), b1,
            w2.astype(jnp.bfloat16), b2,
            w3.T.astype(jnp.bfloat16), b3)


def critic_reference(x, params, *, l3_on_mxu=False):
    """Pure-JAX reference using the same bf16-operand / f32-accumulate math."""
    w1, b1, w2, b2, w3, b3 = params
    xb = x.astype(jnp.bfloat16)
    h1 = jnp.maximum(jnp.dot(xb, w1, preferred_element_type=jnp.float32) + b1, 0.0)
    h2 = jnp.maximum(
        jnp.dot(h1.astype(jnp.bfloat16), w2, preferred_element_type=jnp.float32) + b2, 0.0)
    if l3_on_mxu:
        return jnp.dot(h2.astype(jnp.bfloat16), w3.T,
                       preferred_element_type=jnp.float32) + b3
    return jnp.sum(h2 * w3.astype(jnp.float32), axis=-1, keepdims=True) + b3


if __name__ == "__main__":
    key = jax.random.PRNGKey(0)
    k_params, k_x, k_x2 = jax.random.split(key, 3)

    STATE_SHAPE = 8
    BATCH = 4

    params = init_critic_params(k_params, STATE_SHAPE)
    auto_mxu = _default_l3_on_mxu()

    # Small batch: single full-dim block; exercise both layer-3 epilogues.
    x = jax.random.normal(k_x, (BATCH, STATE_SHAPE), dtype=jnp.float32)
    for on_mxu in (False, True):
        value = jax.block_until_ready(critic_forward(x, params, l3_on_mxu=on_mxu))
        ref = critic_reference(x, params, l3_on_mxu=on_mxu)
        assert value.shape == (BATCH, 1), value.shape
        assert jnp.allclose(value, ref, atol=2e-3, rtol=2e-3), (on_mxu, value, ref)

    # Larger, non-multiple-of-16 batch with a small tile: multi-step grid,
    # balanced tiling, ragged last block, megacore-parallel default.
    x2 = jax.random.normal(k_x2, (300, STATE_SHAPE), dtype=jnp.float32)
    value2 = jax.block_until_ready(critic_forward(x2, params, batch_tile=128))
    ref2 = critic_reference(x2, params, l3_on_mxu=auto_mxu)
    assert value2.shape == (300, 1), value2.shape
    assert jnp.allclose(value2, ref2, atol=2e-3, rtol=2e-3)

    print("KERNEL_OK")
</pallas_src>

<mosaic_0001>
module attributes {stable_mosaic.version = 11 : i64} {
  func.func @_critic_kernel_vpu_l3(%arg0: i32, %arg1: memref<4x8xf32, #tpu.memory_space<vmem>>, %arg2: memref<8x1024xbf16, #tpu.memory_space<vmem>>, %arg3: memref<1x1024xf32, #tpu.memory_space<vmem>>, %arg4: memref<1024x512xbf16, #tpu.memory_space<vmem>>, %arg5: memref<1x512xf32, #tpu.memory_space<vmem>>, %arg6: memref<1x512xbf16, #tpu.memory_space<vmem>>, %arg7: memref<1x1xf32, #tpu.memory_space<smem>>, %arg8: memref<4x1xf32, #tpu.memory_space<vmem>>) attributes {dimension_semantics = [#tpu.dimension_semantics<arbitrary>], iteration_bounds = array<i64: 1>, scalar_prefetch = 0 : i64, scratch_operands = 0 : i64, tpu.core_type = #tpu.core_type<tc>, window_params = [{transform_indices = @transform_0, window_bounds = array<i64: 4, 8>}, {pipeline_mode = #tpu.pipeline_mode<synchronous>, transform_indices = @transform_1, window_bounds = array<i64: 8, 1024>}, {pipeline_mode = #tpu.pipeline_mode<synchronous>, transform_indices = @transform_2, window_bounds = array<i64: 1, 1024>}, {pipeline_mode = #tpu.pipeline_mode<synchronous>, transform_indices = @transform_3, window_bounds = array<i64: 1024, 512>}, {pipeline_mode = #tpu.pipeline_mode<synchronous>, transform_indices = @transform_4, window_bounds = array<i64: 1, 512>}, {pipeline_mode = #tpu.pipeline_mode<synchronous>, transform_indices = @transform_5, window_bounds = array<i64: 1, 512>}, {transform_indices = @transform_6, window_bounds = array<i64: 1, 1>}, {transform_indices = @transform_7, window_bounds = array<i64: 4, 1>}]} {
    %c0 = arith.constant 0 : index
    %c0_0 = arith.constant 0 : index
    %0 = vector.load %arg1[%c0, %c0_0] : memref<4x8xf32, #tpu.memory_space<vmem>>, vector<4x8xf32>
    %1 = arith.truncf %0 : vector<4x8xf32> to vector<4x8xbf16>
    %c0_1 = arith.constant 0 : index
    %c0_2 = arith.constant 0 : index
    %2 = vector.load %arg2[%c0_1, %c0_2] : memref<8x1024xbf16, #tpu.memory_space<vmem>>, vector<8x1024xbf16>
    %cst = arith.constant dense<0.000000e+00> : vector<4x1024xf32>
    %3 = tpu.matmul %1, %2, %cst {dimension_numbers = #tpu.dot_dimension_numbers<[1], [0], [0], [1], [0, 0, 1, 1], [], []>} : vector<4x8xbf16>, vector<8x1024xbf16>, vector<4x1024xf32> -> vector<4x1024xf32>
    %c0_3 = arith.constant 0 : index
    %c0_4 = arith.constant 0 : index
    %4 = vector.load %arg3[%c0_3, %c0_4] : memref<1x1024xf32, #tpu.memory_space<vmem>>, vector<1x1024xf32>
    %5 = vector.broadcast %4 : vector<1x1024xf32> to vector<4x1024xf32>
    %6 = arith.addf %3, %5 : vector<4x1024xf32>
    %cst_5 = arith.constant 0.000000e+00 : f32
    %7 = vector.broadcast %cst_5 : f32 to vector<4x1024xf32>
    %8 = arith.maximumf %6, %7 : vector<4x1024xf32>
    %9 = arith.truncf %8 : vector<4x1024xf32> to vector<4x1024xbf16>
    %c0_6 = arith.constant 0 : index
    %c0_7 = arith.constant 0 : index
    %10 = vector.load %arg4[%c0_6, %c0_7] : memref<1024x512xbf16, #tpu.memory_space<vmem>>, vector<1024x512xbf16>
    %cst_8 = arith.constant dense<0.000000e+00> : vector<4x512xf32>
    %11 = tpu.matmul %9, %10, %cst_8 {dimension_numbers = #tpu.dot_dimension_numbers<[1], [0], [0], [1], [0, 0, 1, 1], [], []>} : vector<4x1024xbf16>, vector<1024x512xbf16>, vector<4x512xf32> -> vector<4x512xf32>
    %c0_9 = arith.constant 0 : index
    %c0_10 = arith.constant 0 : index
    %12 = vector.load %arg5[%c0_9, %c0_10] : memref<1x512xf32, #tpu.memory_space<vmem>>, vector<1x512xf32>
    %13 = vector.broadcast %12 : vector<1x512xf32> to vector<4x512xf32>
    %14 = arith.addf %11, %13 : vector<4x512xf32>
    %cst_11 = arith.constant 0.000000e+00 : f32
    %15 = vector.broadcast %cst_11 : f32 to vector<4x512xf32>
    %16 = arith.maximumf %14, %15 : vector<4x512xf32>
    %c0_12 = arith.constant 0 : index
    %c0_13 = arith.constant 0 : index
    %17 = vector.load %arg6[%c0_12, %c0_13] : memref<1x512xbf16, #tpu.memory_space<vmem>>, vector<1x512xbf16>
    %18 = arith.extf %17 : vector<1x512xbf16> to vector<1x512xf32>
    %19 = vector.broadcast %18 : vector<1x512xf32> to vector<4x512xf32>
    %20 = arith.mulf %16, %19 : vector<4x512xf32>
    %21 = vector.extract_strided_slice %20 {offsets = [0, 0], sizes = [4, 128], strides = [1, 1]} : vector<4x512xf32> to vector<4x128xf32>
    %22 = vector.extract_strided_slice %20 {offsets = [0, 128], sizes = [4, 128], strides = [1, 1]} : vector<4x512xf32> to vector<4x128xf32>
    %23 = arith.addf %21, %22 : vector<4x128xf32>
    %24 = vector.extract_strided_slice %20 {offsets = [0, 256], sizes = [4, 128], strides = [1, 1]} : vector<4x512xf32> to vector<4x128xf32>
    %25 = arith.addf %23, %24 : vector<4x128xf32>
    %26 = vector.extract_strided_slice %20 {offsets = [0, 384], sizes = [4, 128], strides = [1, 1]} : vector<4x512xf32> to vector<4x128xf32>
    %27 = arith.addf %25, %26 : vector<4x128xf32>
    %cst_14 = arith.constant dense<0.000000e+00> : vector<4xf32>
    %28 = vector.multi_reduction <add>, %27, %cst_14 [1] : vector<4x128xf32> to vector<4xf32>
    %29 = vector.shape_cast %28 : vector<4xf32> to vector<4x1xf32>
    %c0_15 = arith.constant 0 : index
    %c0_16 = arith.constant 0 : index
    %30 = memref.load %arg7[%c0_15, %c0_16] : memref<1x1xf32, #tpu.memory_space<smem>>
    %31 = vector.broadcast %30 : f32 to vector<4x1xf32>
    %32 = arith.addf %29, %31 : vector<4x1xf32>
    %c0_17 = arith.constant 0 : index
    %c0_18 = arith.constant 0 : index
    %33 = vector.load %arg8[%c0_17, %c0_18] : memref<4x1xf32, #tpu.memory_space<vmem>>, vector<4x1xf32>
    tpu.vector_store %arg8[%c0_17, %c0_18], %32 {strides = array<i32>} : memref<4x1xf32, #tpu.memory_space<vmem>>, vector<4x1xf32>,
    return
  }
  func.func @transform_0(%arg0: i32) -> (i32, i32) {
    %c0_i32 = arith.constant 0 : i32
    %c0_i32_0 = arith.constant 0 : i32
    return %arg0, %c0_i32 : i32, i32
  }
  func.func @transform_1(%arg0: i32) -> (i32, i32) {
    %c0_i32 = arith.constant 0 : i32
    %c0_i32_0 = arith.constant 0 : i32
    %c0_i32_1 = arith.constant 0 : i32
    return %c0_i32, %c0_i32_0 : i32, i32
  }
  func.func @transform_2(%arg0: i32) -> (i32, i32) {
    %c0_i32 = arith.constant 0 : i32
    %c0_i32_0 = arith.constant 0 : i32
    %c0_i32_1 = arith.constant 0 : i32
    return %c0_i32, %c0_i32_0 : i32, i32
  }
  func.func @transform_3(%arg0: i32) -> (i32, i32) {
    %c0_i32 = arith.constant 0 : i32
    %c0_i32_0 = arith.constant 0 : i32
    %c0_i32_1 = arith.constant 0 : i32
    return %c0_i32, %c0_i32_0 : i32, i32
  }
  func.func @transform_4(%arg0: i32) -> (i32, i32) {
    %c0_i32 = arith.constant 0 : i32
    %c0_i32_0 = arith.constant 0 : i32
    %c0_i32_1 = arith.constant 0 : i32
    return %c0_i32, %c0_i32_0 : i32, i32
  }
  func.func @transform_5(%arg0: i32) -> (i32, i32) {
    %c0_i32 = arith.constant 0 : i32
    %c0_i32_0 = arith.constant 0 : i32
    %c0_i32_1 = arith.constant 0 : i32
    return %c0_i32, %c0_i32_0 : i32, i32
  }
  func.func @transform_6(%arg0: i32) -> (i32, i32) {
    %c0_i32 = arith.constant 0 : i32
    %c0_i32_0 = arith.constant 0 : i32
    %c0_i32_1 = arith.constant 0 : i32
    return %c0_i32, %c0_i32_0 : i32, i32
  }
  func.func @transform_7(%arg0: i32) -> (i32, i32) {
    %c0_i32 = arith.constant 0 : i32
    %c0_i32_0 = arith.constant 0 : i32
    return %arg0, %c0_i32 : i32, i32
  }
}

</mosaic_0001>

<llo_original>
// kernel: tpu_custom_call.1
$region0: #{tpu_custom_call.1}
  #allocation0 [shape = 'u32[]', space=smem, size = 0x4, offset = 0x4, fixed_abs, tag = 'smem constant byte address 0x4 - core index']
  #allocation1 [shape = 'u32[72,128]{1,0:T(1,128)}', space=vmem, size = 0x9000, scoped, tag = 'internal scratch']
  #allocation2 [shape = 'f32[1,1]{1,0:T(1,128)S(6)}', space=smem, size = 0x200, scoped, tag = 'scoped memory for tpu_custom_call.1']
  %s0 = inlined_call_operand.hbm [shape: f32[4,8], index: 0, kind: input, shape index: {}]
  %s1 = inlined_call_operand.hbm [shape: bf16[8,1024], index: 1, kind: input, shape index: {}]
  %s2 = inlined_call_operand.hbm [shape: f32[1,1024], index: 2, kind: input, shape index: {}]
  %s3 = inlined_call_operand.hbm [shape: bf16[1024,512], index: 3, kind: input, shape index: {}]
  %s4 = inlined_call_operand.vmem [shape: f32[1,512], index: 4, kind: input, shape index: {}]
  %s5 = inlined_call_operand.hbm [shape: bf16[1,512], index: 5, kind: input, shape index: {}]
  %s6 = inlined_call_operand.<no memory space> [shape: f32[1,1], index: 6, kind: input, shape index: {}]
  %s7 = inlined_call_operand.vmem [shape: f32[4,1], index: 7, kind: output, shape index: {}]
  %s8 = sld [smem:[#allocation0]]
  $region58: #{tpu_custom_call.1} parent=0
    _
  %s10 = ssub.s32 1, %s8
  %s11 = scalar_select 0, %s10, %s8
  %12 = sst [smem:[#allocation2]] %s6
  $region1: #{tpu_custom_call.1} parent=0
    #allocation3 [shape = 'u8[2048]{0}', space=vmem, size = 0x800, scoped, tag = 'input window, operand 0, single buffered']
    #allocation4 [shape = 's32[1]{0}', space=sflag, size = 0x4, scoped, tag = 'scoped memory for tpu_custom_call.1']
    #allocation5 [shape = 'u8[16384]{0}', space=vmem, size = 0x4000, scoped, tag = 'input window, operand 1, single buffered']
    #allocation6 [shape = 's32[1]{0}', space=sflag, size = 0x4, scoped, tag = 'scoped memory for tpu_custom_call.1']
    #allocation7 [shape = 'u8[4096]{0}', space=vmem, size = 0x1000, scoped, tag = 'input window, operand 2, single buffered']
    #allocation8 [shape = 'u8[1048576]{0}', space=vmem, size = 0x100000, scoped, tag = 'input window, operand 3, single buffered']
    #allocation9 [shape = 's32[1]{0}', space=sflag, size = 0x4, scoped, tag = 'scoped memory for tpu_custom_call.1']
    #allocation10 [shape = 'u8[2048]{0}', space=vmem, size = 0x800, scoped, tag = 'input window, operand 5, single buffered']
    %13 = vsyncpa [#allocation4], 0
    %14 = vsyncpa [#allocation6], 0
    %15 = vsyncpa [#allocation9], 0
    // Predicated region
    $region2: #{tpu_custom_call.1} parent=1 // pred_check
      _
    $region3: #{tpu_custom_call.1} parent=1 // pred_check_branch
      %17 = sbr.rel (0) target = $region5
    $region4: #{tpu_custom_call.1} parent=1 // pred_region
      %19 = vsyncadd [#allocation4], 0
      %s21 = sshll.u32 %s0, 4
      %s22 = int_to_ptr.hbm [resolvable:$true] %s21
      %s23 = sshll.u32 [#allocation3], 4
      %s24 = int_to_ptr.vmem [resolvable:$true] %s23
      %26 = dma.hbm_to_vmem [thread:$0]  %s22, 64, %s24, [#allocation4]
    $region5: #{tpu_custom_call.1} parent=1 // pred_fallthru
      _
    // Predicated region
    $region6: #{tpu_custom_call.1} parent=1 // pred_check
      _
    $region7: #{tpu_custom_call.1} parent=1 // pred_check_branch
      %28 = sbr.rel (0) target = $region9
    $region8: #{tpu_custom_call.1} parent=1 // pred_region
      %30 = vsyncadd [#allocation6], 0
      %s32 = sshll.u32 %s1, 4
      %s33 = int_to_ptr.hbm [resolvable:$true] %s32
      %s34 = sshll.u32 [#allocation5], 4
      %s35 = int_to_ptr.vmem [resolvable:$true] %s34
      %37 = dma.hbm_to_vmem [thread:$0]  %s33, 512, %s35, [#allocation6]
    $region9: #{tpu_custom_call.1} parent=1 // pred_fallthru
      _
    // Predicated region
    $region10: #{tpu_custom_call.1} parent=1 // pred_check
      _
    $region11: #{tpu_custom_call.1} parent=1 // pred_check_branch
      %39 = sbr.rel (0) target = $region13
    $region12: #{tpu_custom_call.1} parent=1 // pred_region
      %41 = vsyncadd [#allocation6], 0
      %s43 = sshll.u32 %s2, 4
      %s44 = int_to_ptr.hbm [resolvable:$true] %s43
      %s45 = sshll.u32 [#allocation7], 4
      %s46 = int_to_ptr.vmem [resolvable:$true] %s45
      %48 = dma.hbm_to_vmem [thread:$0]  %s44, 128, %s46, [#allocation6]
    $region13: #{tpu_custom_call.1} parent=1 // pred_fallthru
      _
    // Predicated region
    $region14: #{tpu_custom_call.1} parent=1 // pred_check
      _
    $region15: #{tpu_custom_call.1} parent=1 // pred_check_branch
      %50 = sbr.rel (0) target = $region17
    $region16: #{tpu_custom_call.1} parent=1 // pred_region
      %52 = vsyncadd [#allocation9], 0
      %s53 = sshll.u32 %s3, 4
      %s54 = int_to_ptr.hbm [resolvable:$true] %s53
      %s55 = sshll.u32 [#allocation8], 4
      %s56 = int_to_ptr.vmem [resolvable:$true] %s55
      %61 = dma.hbm_to_vmem [thread:$0]  %s54, 32768, %s56, [#allocation9], 256, 256, 16
    $region17: #{tpu_custom_call.1} parent=1 // pred_fallthru
      _
    // Predicated region
    $region18: #{tpu_custom_call.1} parent=1 // pred_check
      _
    $region19: #{tpu_custom_call.1} parent=1 // pred_check_branch
      %63 = sbr.rel (0) target = $region21
    $region20: #{tpu_custom_call.1} parent=1 // pred_region
      _
    $region21: #{tpu_custom_call.1} parent=1 // pred_fallthru
      _
    // Predicated region
    $region22: #{tpu_custom_call.1} parent=1 // pred_check
      _
    $region23: #{tpu_custom_call.1} parent=1 // pred_check_branch
      %65 = sbr.rel (0) target = $region25
    $region24: #{tpu_custom_call.1} parent=1 // pred_region
      %67 = vsyncadd [#allocation9], 0
      %s69 = sshll.u32 %s5, 4
      %s70 = int_to_ptr.hbm [resolvable:$true] %s69
      %s71 = sshll.u32 [#allocation10], 4
      %s72 = int_to_ptr.vmem [resolvable:$true] %s71
      %74 = dma.hbm_to_vmem [thread:$0]  %s70, 64, %s72, [#allocation9]
    $region25: #{tpu_custom_call.1} parent=1 // pred_fallthru
      _
    // Predicated region
    $region26: #{tpu_custom_call.1} parent=1 // pred_check
      _
    $region27: #{tpu_custom_call.1} parent=1 // pred_check_branch
      %76 = sbr.rel (0) target = $region29
    $region28: #{tpu_custom_call.1} parent=1 // pred_region
      _
    $region29: #{tpu_custom_call.1} parent=1 // pred_fallthru
      _
    // Predicated region
    $region30: #{tpu_custom_call.1} parent=1 // pred_check
      _
    $region31: #{tpu_custom_call.1} parent=1 // pred_check_branch
      %78 = sbr.rel (0) target = $region33
    $region32: #{tpu_custom_call.1} parent=1 // pred_region
      %80 = dma.done [#allocation4], 64
    $region33: #{tpu_custom_call.1} parent=1 // pred_fallthru
      _
    // Predicated region
    $region34: #{tpu_custom_call.1} parent=1 // pred_check
      _
    $region35: #{tpu_custom_call.1} parent=1 // pred_check_branch
      %82 = sbr.rel (0) target = $region37
    $region36: #{tpu_custom_call.1} parent=1 // pred_region
      %84 = dma.done [#allocation6], 512
    $region37: #{tpu_custom_call.1} parent=1 // pred_fallthru
      _
    // Predicated region
    $region38: #{tpu_custom_call.1} parent=1 // pred_check
      _
    $region39: #{tpu_custom_call.1} parent=1 // pred_check_branch
      %86 = sbr.rel (0) target = $region41
    $region40: #{tpu_custom_call.1} parent=1 // pred_region
      %88 = dma.done [#allocation6], 128
    $region41: #{tpu_custom_call.1} parent=1 // pred_fallthru
      _
    // Predicated region
    $region42: #{tpu_custom_call.1} parent=1 // pred_check
      _
    $region43: #{tpu_custom_call.1} parent=1 // pred_check_branch
      %90 = sbr.rel (0) target = $region45
    $region44: #{tpu_custom_call.1} parent=1 // pred_region
      %92 = dma.done [#allocation9], 32768
    $region45: #{tpu_custom_call.1} parent=1 // pred_fallthru
      _
    // Predicated region
    $region46: #{tpu_custom_call.1} parent=1 // pred_check
      _
    $region47: #{tpu_custom_call.1} parent=1 // pred_check_branch
      %94 = sbr.rel (0) target = $region49
    $region48: #{tpu_custom_call.1} parent=1 // pred_region
      %96 = dma.done [#allocation9], 64
    $region49: #{tpu_custom_call.1} parent=1 // pred_fallthru
      _
    %v98 = vld [vmem:[#allocation3] sm:$0xf]
    %v99 = vpack.c.bf16 %v98, %v98
    %v100 = vld [vmem:[#allocation5] sm:$0xff]
    %v101 = vld [vmem:[#allocation5 + $0x8] sm:$0xff]
    %v102 = vld [vmem:[#allocation5 + $0x10] sm:$0xff]
    %v103 = vld [vmem:[#allocation5 + $0x18] sm:$0xff]
    %v104 = vld [vmem:[#allocation7] sm:$0xff]
    %v106 = vperm.slane %v104, 0
    %v107 = vperm.slane %v104, 1
    %v108 = vperm.slane %v104, 2
    %v109 = vperm.slane %v104, 3
    %v110 = vperm.slane %v104, 4
    %v111 = vperm.slane %v104, 5
    %v112 = vperm.slane %v104, 6
    %v113 = vperm.slane %v104, 7
    %v126 = vunpack.c.l.b16 %v100
    %v127 = vunpack.c.h.b16 %v100
    %v128 = vunpack.c.l.b16 %v101
    %v129 = vunpack.c.h.b16 %v101
    %v130 = vunpack.c.l.b16 %v102
    %v131 = vunpack.c.h.b16 %v102
    %v132 = vunpack.c.l.b16 %v103
    %v133 = vunpack.c.h.b16 %v103
    %v134 = vpack.c.b16 %v126, %v126
    %v135 = vpack.c.b16 %v127, %v127
    %v136 = vpack.c.b16 %v128, %v128
    %v137 = vpack.c.b16 %v129, %v129
    %v138 = vpack.c.b16 %v130, %v130
    %v139 = vpack.c.b16 %v131, %v131
    %v140 = vpack.c.b16 %v132, %v132
    %v141 = vpack.c.b16 %v133, %v133
    %vm142 = vcmask 64512
    %v144 = vsel %vm142, %v99, 0
    %vm146 = vcmask 1043456
    %v148 = vsel %vm146, %v134, 0
    %v151 = vsel %vm146, %v135, 0
    %v154 = vsel %vm146, %v136, 0
    %v157 = vsel %vm146, %v137, 0
    %v160 = vsel %vm146, %v138, 0
    %v163 = vsel %vm146, %v139, 0
    %v166 = vsel %vm146, %v140, 0
    %v169 = vsel %vm146, %v141, 0
    %171 = vmatpush.bf16.msra.mxu0 0
    %172 = vmatpush.bf16.msra.mxu0 0
    %173 = vmatpush.bf16.msra.mxu0 0
    %174 = vmatpush.bf16.msra.mxu0 0
    %175 = vmatpush.bf16.msra.mxu0 0
    %176 = vmatpush.bf16.msra.mxu0 0
    %177 = vmatpush.bf16.msra.mxu0 0
    %178 = vmatpush.bf16.msra.mxu0 %v148
    %179 = vmatmul.bf16.gmra.mxu0 %v144
    %v180 = vpop.f32.mrf.mxu0
    %v181 = vadd.f32 %v106, %v180
    %v182 = vpop.f32.mrf.mxu0
    %183 = vdwg.mxu0
    %184 = vmatpush.bf16.msra.mxu0 0
    %185 = vmatpush.bf16.msra.mxu0 0
    %186 = vmatpush.bf16.msra.mxu0 0
    %187 = vmatpush.bf16.msra.mxu0 0
    %188 = vmatpush.bf16.msra.mxu0 0
    %189 = vmatpush.bf16.msra.mxu0 0
    %190 = vmatpush.bf16.msra.mxu0 0
    %191 = vmatpush.bf16.msra.mxu0 %v151
    %192 = vmatmul.bf16.gmra.mxu0 %v144
    %v193 = vpop.f32.mrf.mxu0
    %v194 = vadd.f32 %v107, %v193
    %v195 = vpop.f32.mrf.mxu0
    %196 = vdwg.mxu0
    %197 = vmatpush.bf16.msra.mxu0 0
    %198 = vmatpush.bf16.msra.mxu0 0
    %199 = vmatpush.bf16.msra.mxu0 0
    %200 = vmatpush.bf16.msra.mxu0 0
    %201 = vmatpush.bf16.msra.mxu0 0
    %202 = vmatpush.bf16.msra.mxu0 0
    %203 = vmatpush.bf16.msra.mxu0 0
    %204 = vmatpush.bf16.msra.mxu0 %v154
    %205 = vmatmul.bf16.gmra.mxu0 %v144
    %v206 = vpop.f32.mrf.mxu0
    %v207 = vadd.f32 %v108, %v206
    %v208 = vpop.f32.mrf.mxu0
    %209 = vdwg.mxu0
    %210 = vmatpush.bf16.msra.mxu0 0
    %211 = vmatpush.bf16.msra.mxu0 0
    %212 = vmatpush.bf16.msra.mxu0 0
    %213 = vmatpush.bf16.msra.mxu0 0
    %214 = vmatpush.bf16.msra.mxu0 0
    %215 = vmatpush.bf16.msra.mxu0 0
    %216 = vmatpush.bf16.msra.mxu0 0
    %217 = vmatpush.bf16.msra.mxu0 %v157
    %218 = vmatmul.bf16.gmra.mxu0 %v144
    %v219 = vpop.f32.mrf.mxu0
    %v220 = vadd.f32 %v109, %v219
    %v221 = vpop.f32.mrf.mxu0
    %222 = vdwg.mxu0
    %223 = vmatpush.bf16.msra.mxu0 0
    %224 = vmatpush.bf16.msra.mxu0 0
    %225 = vmatpush.bf16.msra.mxu0 0
    %226 = vmatpush.bf16.msra.mxu0 0
    %227 = vmatpush.bf16.msra.mxu0 0
    %228 = vmatpush.bf16.msra.mxu0 0
    %229 = vmatpush.bf16.msra.mxu0 0
    %230 = vmatpush.bf16.msra.mxu0 %v160
    %231 = vmatmul.bf16.gmra.mxu0 %v144
    %v232 = vpop.f32.mrf.mxu0
    %v233 = vadd.f32 %v110, %v232
    %v234 = vpop.f32.mrf.mxu0
    %235 = vdwg.mxu0
    %236 = vmatpush.bf16.msra.mxu0 0
    %237 = vmatpush.bf16.msra.mxu0 0
    %238 = vmatpush.bf16.msra.mxu0 0
    %239 = vmatpush.bf16.msra.mxu0 0
    %240 = vmatpush.bf16.msra.mxu0 0
    %241 = vmatpush.bf16.msra.mxu0 0
    %242 = vmatpush.bf16.msra.mxu0 0
    %243 = vmatpush.bf16.msra.mxu0 %v163
    %244 = vmatmul.bf16.gmra.mxu0 %v144
    %v245 = vpop.f32.mrf.mxu0
    %v246 = vadd.f32 %v111, %v245
    %v247 = vpop.f32.mrf.mxu0
    %248 = vdwg.mxu0
    %249 = vmatpush.bf16.msra.mxu0 0
    %250 = vmatpush.bf16.msra.mxu0 0
    %251 = vmatpush.bf16.msra.mxu0 0
    %252 = vmatpush.bf16.msra.mxu0 0
    %253 = vmatpush.bf16.msra.mxu0 0
    %254 = vmatpush.bf16.msra.mxu0 0
    %255 = vmatpush.bf16.msra.mxu0 0
    %256 = vmatpush.bf16.msra.mxu0 %v166
    %257 = vmatmul.bf16.gmra.mxu0 %v144
    %v258 = vpop.f32.mrf.mxu0
    %v259 = vadd.f32 %v112, %v258
    %v260 = vpop.f32.mrf.mxu0
    %261 = vdwg.mxu0
    %262 = vmatpush.bf16.msra.mxu0 0
    %263 = vmatpush.bf16.msra.mxu0 0
    %264 = vmatpush.bf16.msra.mxu0 0
    %265 = vmatpush.bf16.msra.mxu0 0
    %266 = vmatpush.bf16.msra.mxu0 0
    %267 = vmatpush.bf16.msra.mxu0 0
    %268 = vmatpush.bf16.msra.mxu0 0
    %269 = vmatpush.bf16.msra.mxu0 %v169
    %270 = vmatmul.bf16.gmra.mxu0 %v144
    %v271 = vpop.f32.mrf.mxu0
    %v272 = vadd.f32 %v113, %v271
    %v273 = vpop.f32.mrf.mxu0
    %274 = vdwg.mxu0
    %v275 = vmax.f32 %v181, 0.0
    %v276 = vmax.f32 %v194, 0.0
    %v277 = vmax.f32 %v207, 0.0
    %v278 = vmax.f32 %v220, 0.0
    %v279 = vmax.f32 %v233, 0.0
    %v280 = vmax.f32 %v246, 0.0
    %v281 = vmax.f32 %v259, 0.0
    %v282 = vmax.f32 %v272, 0.0
    %v283 = vpack.c.bf16 %v275, %v275
    %v284 = vpack.c.bf16 %v276, %v276
    %v285 = vpack.c.bf16 %v277, %v277
    %v286 = vpack.c.bf16 %v278, %v278
    %v287 = vpack.c.bf16 %v279, %v279
    %v288 = vpack.c.bf16 %v280, %v280
    %v289 = vpack.c.bf16 %v281, %v281
    %v290 = vpack.c.bf16 %v282, %v282
    %v291 = vld [vmem:[#allocation8] sm:$0xff]
    %v292 = vld [vmem:[#allocation8 + $0x8] sm:$0xff]
    %v293 = vld [vmem:[#allocation8 + $0x10] sm:$0xff]
    %v294 = vld [vmem:[#allocation8 + $0x18] sm:$0xff]
    %v295 = vld [vmem:[#allocation8 + $0x20] sm:$0xff]
    %v296 = vld [vmem:[#allocation8 + $0x28] sm:$0xff]
    %v297 = vld [vmem:[#allocation8 + $0x30] sm:$0xff]
    %v298 = vld [vmem:[#allocation8 + $0x38] sm:$0xff]
    %v299 = vld [vmem:[#allocation8 + $0x40] sm:$0xff]
    %v300 = vld [vmem:[#allocation8 + $0x48] sm:$0xff]
    %v301 = vld [vmem:[#allocation8 + $0x50] sm:$0xff]
    %v302 = vld [vmem:[#allocation8 + $0x58] sm:$0xff]
    %v303 = vld [vmem:[#allocation8 + $0x60] sm:$0xff]
    %v304 = vld [vmem:[#allocation8 + $0x68] sm:$0xff]
    %v305 = vld [vmem:[#allocation8 + $0x70] sm:$0xff]
    %v306 = vld [vmem:[#allocation8 + $0x78] sm:$0xff]
    %v307 = vld [vmem:[#allocation8 + $0x80] sm:$0xff]
    %v308 = vld [vmem:[#allocation8 + $0x88] sm:$0xff]
    %v309 = vld [vmem:[#allocation8 + $0x90] sm:$0xff]
    %v310 = vld [vmem:[#allocation8 + $0x98] sm:$0xff]
    %v311 = vld [vmem:[#allocation8 + $0xa0] sm:$0xff]
    %v312 = vld [vmem:[#allocation8 + $0xa8] sm:$0xff]
    %v313 = vld [vmem:[#allocation8 + $0xb0] sm:$0xff]
    %v314 = vld [vmem:[#allocation8 + $0xb8] sm:$0xff]
    %v315 = vld [vmem:[#allocation8 + $0xc0] sm:$0xff]
    %v316 = vld [vmem:[#allocation8 + $0xc8] sm:$0xff]
    %v317 = vld [vmem:[#allocation8 + $0xd0] sm:$0xff]
    %v318 = vld [vmem:[#allocation8 + $0xd8] sm:$0xff]
    %v319 = vld [vmem:[#allocation8 + $0xe0] sm:$0xff]
    %v320 = vld [vmem:[#allocation8 + $0xe8] sm:$0xff]
    %v321 = vld [vmem:[#allocation8 + $0xf0] sm:$0xff]
    %v322 = vld [vmem:[#allocation8 + $0xf8] sm:$0xff]
    %v323 = vld [vmem:[#allocation8 + $0x100] sm:$0xff]
    %v324 = vld [vmem:[#allocation8 + $0x108] sm:$0xff]
    %v325 = vld [vmem:[#allocation8 + $0x110] sm:$0xff]
    %v326 = vld [vmem:[#allocation8 + $0x118] sm:$0xff]
    %v327 = vld [vmem:[#allocation8 + $0x120] sm:$0xff]
    %v328 = vld [vmem:[#allocation8 + $0x128] sm:$0xff]
    %v329 = vld [vmem:[#allocation8 + $0x130] sm:$0xff]
    %v330 = vld [vmem:[#allocation8 + $0x138] sm:$0xff]
    %v331 = vld [vmem:[#allocation8 + $0x140] sm:$0xff]
    %v332 = vld [vmem:[#allocation8 + $0x148] sm:$0xff]
    %v333 = vld [vmem:[#allocation8 + $0x150] sm:$0xff]
    %v334 = vld [vmem:[#allocation8 + $0x158] sm:$0xff]
    %v335 = vld [vmem:[#allocation8 + $0x160] sm:$0xff]
    %v336 = vld [vmem:[#allocation8 + $0x168] sm:$0xff]
    %v337 = vld [vmem:[#allocation8 + $0x170] sm:$0xff]
    %v338 = vld [vmem:[#allocation8 + $0x178] sm:$0xff]
    %v339 = vld [vmem:[#allocation8 + $0x180] sm:$0xff]
    %v340 = vld [vmem:[#allocation8 + $0x188] sm:$0xff]
    %v341 = vld [vmem:[#allocation8 + $0x190] sm:$0xff]
    %v342 = vld [vmem:[#allocation8 + $0x198] sm:$0xff]
    %v343 = vld [vmem:[#allocation8 + $0x1a0] sm:$0xff]
    %v344 = vld [vmem:[#allocation8 + $0x1a8] sm:$0xff]
    %v345 = vld [vmem:[#allocation8 + $0x1b0] sm:$0xff]
    %v346 = vld [vmem:[#allocation8 + $0x1b8] sm:$0xff]
    %v347 = vld [vmem:[#allocation8 + $0x1c0] sm:$0xff]
    %v348 = vld [vmem:[#allocation8 + $0x1c8] sm:$0xff]
    %v349 = vld [vmem:[#allocation8 + $0x1d0] sm:$0xff]
    %v350 = vld [vmem:[#allocation8 + $0x1d8] sm:$0xff]
    %v351 = vld [vmem:[#allocation8 + $0x1e0] sm:$0xff]
    %v352 = vld [vmem:[#allocation8 + $0x1e8] sm:$0xff]
    %v353 = vld [vmem:[#allocation8 + $0x1f0] sm:$0xff]
    %v354 = vld [vmem:[#allocation8 + $0x1f8] sm:$0xff]
    %v355 = vld [vmem:[#allocation8 + $0x200] sm:$0xff]
    %v356 = vld [vmem:[#allocation8 + $0x208] sm:$0xff]
    %v357 = vld [vmem:[#allocation8 + $0x210] sm:$0xff]
    %v358 = vld [vmem:[#allocation8 + $0x218] sm:$0xff]
    %v359 = vld [vmem:[#allocation8 + $0x220] sm:$0xff]
    %v360 = vld [vmem:[#allocation8 + $0x228] sm:$0xff]
    %v361 = vld [vmem:[#allocation8 + $0x230] sm:$0xff]
    %v362 = vld [vmem:[#allocation8 + $0x238] sm:$0xff]
    %v363 = vld [vmem:[#allocation8 + $0x240] sm:$0xff]
    %v364 = vld [vmem:[#allocation8 + $0x248] sm:$0xff]
    %v365 = vld [vmem:[#allocation8 + $0x250] sm:$0xff]
    %v366 = vld [vmem:[#allocation8 + $0x258] sm:$0xff]
    %v367 = vld [vmem:[#allocation8 + $0x260] sm:$0xff]
    %v368 = vld [vmem:[#allocation8 + $0x268] sm:$0xff]
    %v369 = vld [vmem:[#allocation8 + $0x270] sm:$0xff]
    %v370 = vld [vmem:[#allocation8 + $0x278] sm:$0xff]
    %v371 = vld [vmem:[#allocation8 + $0x280] sm:$0xff]
    %v372 = vld [vmem:[#allocation8 + $0x288] sm:$0xff]
    %v373 = vld [vmem:[#allocation8 + $0x290] sm:$0xff]
    %v374 = vld [vmem:[#allocation8 + $0x298] sm:$0xff]
    %v375 = vld [vmem:[#allocation8 + $0x2a0] sm:$0xff]
    %v376 = vld [vmem:[#allocation8 + $0x2a8] sm:$0xff]
    %v377 = vld [vmem:[#allocation8 + $0x2b0] sm:$0xff]
    %v378 = vld [vmem:[#allocation8 + $0x2b8] sm:$0xff]
    %v379 = vld [vmem:[#allocation8 + $0x2c0] sm:$0xff]
    %v380 = vld [vmem:[#allocation8 + $0x2c8] sm:$0xff]
    %v381 = vld [vmem:[#allocation8 + $0x2d0] sm:$0xff]
    %v382 = vld [vmem:[#allocation8 + $0x2d8] sm:$0xff]
    %v383 = vld [vmem:[#allocation8 + $0x2e0] sm:$0xff]
    %v384 = vld [vmem:[#allocation8 + $0x2e8] sm:$0xff]
    %v385 = vld [vmem:[#allocation8 + $0x2f0] sm:$0xff]
    %v386 = vld [vmem:[#allocation8 + $0x2f8] sm:$0xff]
    %v387 = vld [vmem:[#allocation8 + $0x300] sm:$0xff]
    %v388 = vld [vmem:[#allocation8 + $0x308] sm:$0xff]
    %v389 = vld [vmem:[#allocation8 + $0x310] sm:$0xff]
    %v390 = vld [vmem:[#allocation8 + $0x318] sm:$0xff]
    %v391 = vld [vmem:[#allocation8 + $0x320] sm:$0xff]
    %v392 = vld [vmem:[#allocation8 + $0x328] sm:$0xff]
    %v393 = vld [vmem:[#allocation8 + $0x330] sm:$0xff]
    %v394 = vld [vmem:[#allocation8 + $0x338] sm:$0xff]
    %v395 = vld [vmem:[#allocation8 + $0x340] sm:$0xff]
    %v396 = vld [vmem:[#allocation8 + $0x348] sm:$0xff]
    %v397 = vld [vmem:[#allocation8 + $0x350] sm:$0xff]
    %v398 = vld [vmem:[#allocation8 + $0x358] sm:$0xff]
    %v399 = vld [vmem:[#allocation8 + $0x360] sm:$0xff]
    %v400 = vld [vmem:[#allocation8 + $0x368] sm:$0xff]
    %v401 = vld [vmem:[#allocation8 + $0x370] sm:$0xff]
    %v402 = vld [vmem:[#allocation8 + $0x378] sm:$0xff]
    %v403 = vld [vmem:[#allocation8 + $0x380] sm:$0xff]
    %v404 = vld [vmem:[#allocation8 + $0x388] sm:$0xff]
    %v405 = vld [vmem:[#allocation8 + $0x390] sm:$0xff]
    %v406 = vld [vmem:[#allocation8 + $0x398] sm:$0xff]
    %v407 = vld [vmem:[#allocation8 + $0x3a0] sm:$0xff]
    %v408 = vld [vmem:[#allocation8 + $0x3a8] sm:$0xff]
    %v409 = vld [vmem:[#allocation8 + $0x3b0] sm:$0xff]
    %v410 = vld [vmem:[#allocation8 + $0x3b8] sm:$0xff]
    %v411 = vld [vmem:[#allocation8 + $0x3c0] sm:$0xff]
    %v412 = vld [vmem:[#allocation8 + $0x3c8] sm:$0xff]
    %v413 = vld [vmem:[#allocation8 + $0x3d0] sm:$0xff]
    %v414 = vld [vmem:[#allocation8 + $0x3d8] sm:$0xff]
    %v415 = vld [vmem:[#allocation8 + $0x3e0] sm:$0xff]
    %v416 = vld [vmem:[#allocation8 + $0x3e8] sm:$0xff]
    %v417 = vld [vmem:[#allocation8 + $0x3f0] sm:$0xff]
    %v418 = vld [vmem:[#allocation8 + $0x3f8] sm:$0xff]
    %v419 = vld [vmem:[#allocation8 + $0x400] sm:$0xff]
    %v420 = vld [vmem:[#allocation8 + $0x408] sm:$0xff]
    %v421 = vld [vmem:[#allocation8 + $0x410] sm:$0xff]
    %v422 = vld [vmem:[#allocation8 + $0x418] sm:$0xff]
    %v423 = vld [vmem:[#allocation8 + $0x420] sm:$0xff]
    %v424 = vld [vmem:[#allocation8 + $0x428] sm:$0xff]
    %v425 = vld [vmem:[#allocation8 + $0x430] sm:$0xff]
    %v426 = vld [vmem:[#allocation8 + $0x438] sm:$0xff]
    %v427 = vld [vmem:[#allocation8 + $0x440] sm:$0xff]
    %v428 = vld [vmem:[#allocation8 + $0x448] sm:$0xff]
    %v429 = vld [vmem:[#allocation8 + $0x450] sm:$0xff]
    %v430 = vld [vmem:[#allocation8 + $0x458] sm:$0xff]
    %v431 = vld [vmem:[#allocation8 + $0x460] sm:$0xff]
    %v432 = vld [vmem:[#allocation8 + $0x468] sm:$0xff]
    %v433 = vld [vmem:[#allocation8 + $0x470] sm:$0xff]
    %v434 = vld [vmem:[#allocation8 + $0x478] sm:$0xff]
    %v435 = vld [vmem:[#allocation8 + $0x480] sm:$0xff]
    %v436 = vld [vmem:[#allocation8 + $0x488] sm:$0xff]
    %v437 = vld [vmem:[#allocation8 + $0x490] sm:$0xff]
    %v438 = vld [vmem:[#allocation8 + $0x498] sm:$0xff]
    %v439 = vld [vmem:[#allocation8 + $0x4a0] sm:$0xff]
    %v440 = vld [vmem:[#allocation8 + $0x4a8] sm:$0xff]
    %v441 = vld [vmem:[#allocation8 + $0x4b0] sm:$0xff]
    %v442 = vld [vmem:[#allocation8 + $0x4b8] sm:$0xff]
    %v443 = vld [vmem:[#allocation8 + $0x4c0] sm:$0xff]
    %v444 = vld [vmem:[#allocation8 + $0x4c8] sm:$0xff]
    %v445 = vld [vmem:[#allocation8 + $0x4d0] sm:$0xff]
    %v446 = vld [vmem:[#allocation8 + $0x4d8] sm:$0xff]
    %v447 = vld [vmem:[#allocation8 + $0x4e0] sm:$0xff]
    %v448 = vld [vmem:[#allocation8 + $0x4e8] sm:$0xff]
    %v449 = vld [vmem:[#allocation8 + $0x4f0] sm:$0xff]
    %v450 = vld [vmem:[#allocation8 + $0x4f8] sm:$0xff]
    %v451 = vld [vmem:[#allocation8 + $0x500] sm:$0xff]
    %v452 = vld [vmem:[#allocation8 + $0x508] sm:$0xff]
    %v453 = vld [vmem:[#allocation8 + $0x510] sm:$0xff]
    %v454 = vld [vmem:[#allocation8 + $0x518] sm:$0xff]
    %v455 = vld [vmem:[#allocation8 + $0x520] sm:$0xff]
    %v456 = vld [vmem:[#allocation8 + $0x528] sm:$0xff]
    %v457 = vld [vmem:[#allocation8 + $0x530] sm:$0xff]
    %v458 = vld [vmem:[#allocation8 + $0x538] sm:$0xff]
    %v459 = vld [vmem:[#allocation8 + $0x540] sm:$0xff]
    %v460 = vld [vmem:[#allocation8 + $0x548] sm:$0xff]
    %v461 = vld [vmem:[#allocation8 + $0x550] sm:$0xff]
    %v462 = vld [vmem:[#allocation8 + $0x558] sm:$0xff]
    %v463 = vld [vmem:[#allocation8 + $0x560] sm:$0xff]
    %v464 = vld [vmem:[#allocation8 + $0x568] sm:$0xff]
    %v465 = vld [vmem:[#allocation8 + $0x570] sm:$0xff]
    %v466 = vld [vmem:[#allocation8 + $0x578] sm:$0xff]
    %v467 = vld [vmem:[#allocation8 + $0x580] sm:$0xff]
    %v468 = vld [vmem:[#allocation8 + $0x588] sm:$0xff]
    %v469 = vld [vmem:[#allocation8 + $0x590] sm:$0xff]
    %v470 = vld [vmem:[#allocation8 + $0x598] sm:$0xff]
    %v471 = vld [vmem:[#allocation8 + $0x5a0] sm:$0xff]
    %v472 = vld [vmem:[#allocation8 + $0x5a8] sm:$0xff]
    %v473 = vld [vmem:[#allocation8 + $0x5b0] sm:$0xff]
    %v474 = vld [vmem:[#allocation8 + $0x5b8] sm:$0xff]
    %v475 = vld [vmem:[#allocation8 + $0x5c0] sm:$0xff]
    %v476 = vld [vmem:[#allocation8 + $0x5c8] sm:$0xff]
    %v477 = vld [vmem:[#allocation8 + $0x5d0] sm:$0xff]
    %v478 = vld [vmem:[#allocation8 + $0x5d8] sm:$0xff]
    %v479 = vld [vmem:[#allocation8 + $0x5e0] sm:$0xff]
    %v480 = vld [vmem:[#allocation8 + $0x5e8] sm:$0xff]
    %v481 = vld [vmem:[#allocation8 + $0x5f0] sm:$0xff]
    %v482 = vld [vmem:[#allocation8 + $0x5f8] sm:$0xff]
    %v483 = vld [vmem:[#allocation8 + $0x600] sm:$0xff]
    %v484 = vld [vmem:[#allocation8 + $0x608] sm:$0xff]
    %v485 = vld [vmem:[#allocation8 + $0x610] sm:$0xff]
    %v486 = vld [vmem:[#allocation8 + $0x618] sm:$0xff]
    %v487 = vld [vmem:[#allocation8 + $0x620] sm:$0xff]
    %v488 = vld [vmem:[#allocation8 + $0x628] sm:$0xff]
    %v489 = vld [vmem:[#allocation8 + $0x630] sm:$0xff]
    %v490 = vld [vmem:[#allocation8 + $0x638] sm:$0xff]
    %v491 = vld [vmem:[#allocation8 + $0x640] sm:$0xff]
    %v492 = vld [vmem:[#allocation8 + $0x648] sm:$0xff]
    %v493 = vld [vmem:[#allocation8 + $0x650] sm:$0xff]
    %v494 = vld [vmem:[#allocation8 + $0x658] sm:$0xff]
    %v495 = vld [vmem:[#allocation8 + $0x660] sm:$0xff]
    %v496 = vld [vmem:[#allocation8 + $0x668] sm:$0xff]
    %v497 = vld [vmem:[#allocation8 + $0x670] sm:$0xff]
    %v498 = vld [vmem:[#allocation8 + $0x678] sm:$0xff]
    %v499 = vld [vmem:[#allocation8 + $0x680] sm:$0xff]
    %v500 = vld [vmem:[#allocation8 + $0x688] sm:$0xff]
    %v501 = vld [vmem:[#allocation8 + $0x690] sm:$0xff]
    %v502 = vld [vmem:[#allocation8 + $0x698] sm:$0xff]
    %v503 = vld [vmem:[#allocation8 + $0x6a0] sm:$0xff]
    %v504 = vld [vmem:[#allocation8 + $0x6a8] sm:$0xff]
    %v505 = vld [vmem:[#allocation8 + $0x6b0] sm:$0xff]
    %v506 = vld [vmem:[#allocation8 + $0x6b8] sm:$0xff]
    %v507 = vld [vmem:[#allocation8 + $0x6c0] sm:$0xff]
    %v508 = vld [vmem:[#allocation8 + $0x6c8] sm:$0xff]
    %v509 = vld [vmem:[#allocation8 + $0x6d0] sm:$0xff]
    %v510 = vld [vmem:[#allocation8 + $0x6d8] sm:$0xff]
    %v511 = vld [vmem:[#allocation8 + $0x6e0] sm:$0xff]
    %v512 = vld [vmem:[#allocation8 + $0x6e8] sm:$0xff]
    %v513 = vld [vmem:[#allocation8 + $0x6f0] sm:$0xff]
    %v514 = vld [vmem:[#allocation8 + $0x6f8] sm:$0xff]
    %v515 = vld [vmem:[#allocation8 + $0x700] sm:$0xff]
    %v516 = vld [vmem:[#allocation8 + $0x708] sm:$0xff]
    %v517 = vld [vmem:[#allocation8 + $0x710] sm:$0xff]
    %v518 = vld [vmem:[#allocation8 + $0x718] sm:$0xff]
    %v519 = vld [vmem:[#allocation8 + $0x720] sm:$0xff]
    %v520 = vld [vmem:[#allocation8 + $0x728] sm:$0xff]
    %v521 = vld [vmem:[#allocation8 + $0x730] sm:$0xff]
    %v522 = vld [vmem:[#allocation8 + $0x738] sm:$0xff]
    %v523 = vld [vmem:[#allocation8 + $0x740] sm:$0xff]
    %v524 = vld [vmem:[#allocation8 + $0x748] sm:$0xff]
    %v525 = vld [vmem:[#allocation8 + $0x750] sm:$0xff]
    %v526 = vld [vmem:[#allocation8 + $0x758] sm:$0xff]
    %v527 = vld [vmem:[#allocation8 + $0x760] sm:$0xff]
    %v528 = vld [vmem:[#allocation8 + $0x768] sm:$0xff]
    %v529 = vld [vmem:[#allocation8 + $0x770] sm:$0xff]
    %v530 = vld [vmem:[#allocation8 + $0x778] sm:$0xff]
    %v531 = vld [vmem:[#allocation8 + $0x780] sm:$0xff]
    %v532 = vld [vmem:[#allocation8 + $0x788] sm:$0xff]
    %v533 = vld [vmem:[#allocation8 + $0x790] sm:$0xff]
    %v534 = vld [vmem:[#allocation8 + $0x798] sm:$0xff]
    %v535 = vld [vmem:[#allocation8 + $0x7a0] sm:$0xff]
    %v536 = vld [vmem:[#allocation8 + $0x7a8] sm:$0xff]
    %v537 = vld [vmem:[#allocation8 + $0x7b0] sm:$0xff]
    %v538 = vld [vmem:[#allocation8 + $0x7b8] sm:$0xff]
    %v539 = vld [vmem:[#allocation8 + $0x7c0] sm:$0xff]
    %v540 = vld [vmem:[#allocation8 + $0x7c8] sm:$0xff]
    %v541 = vld [vmem:[#allocation8 + $0x7d0] sm:$0xff]
    %v542 = vld [vmem:[#allocation8 + $0x7d8] sm:$0xff]
    %v543 = vld [vmem:[#allocation8 + $0x7e0] sm:$0xff]
    %v544 = vld [vmem:[#allocation8 + $0x7e8] sm:$0xff]
    %v545 = vld [vmem:[#allocation8 + $0x7f0] sm:$0xff]
    %v546 = vld [vmem:[#allocation8 + $0x7f8] sm:$0xff]
    %v547 = vld [vmem:[%s4] sm:$0xf]
    %v549 = vperm.slane %v547, 0
    %v550 = vperm.slane %v547, 1
    %v551 = vperm.slane %v547, 2
    %v552 = vperm.slane %v547, 3
    %v813 = vunpack.c.l.b16 %v291
    %v814 = vunpack.c.h.b16 %v291
    %v815 = vunpack.c.l.b16 %v292
    %v816 = vunpack.c.h.b16 %v292
    %v817 = vunpack.c.l.b16 %v293
    %v818 = vunpack.c.h.b16 %v293
    %v819 = vunpack.c.l.b16 %v294
    %v820 = vunpack.c.h.b16 %v294
    %v821 = vunpack.c.l.b16 %v295
    %v822 = vunpack.c.h.b16 %v295
    %v823 = vunpack.c.l.b16 %v296
    %v824 = vunpack.c.h.b16 %v296
    %v825 = vunpack.c.l.b16 %v297
    %v826 = vunpack.c.h.b16 %v297
    %v827 = vunpack.c.l.b16 %v298
    %v828 = vunpack.c.h.b16 %v298
    %v829 = vunpack.c.l.b16 %v299
    %v830 = vunpack.c.h.b16 %v299
    %v831 = vunpack.c.l.b16 %v300
    %v832 = vunpack.c.h.b16 %v300
    %v833 = vunpack.c.l.b16 %v301
    %v834 = vunpack.c.h.b16 %v301
    %v835 = vunpack.c.l.b16 %v302
    %v836 = vunpack.c.h.b16 %v302
    %v837 = vunpack.c.l.b16 %v303
    %v838 = vunpack.c.h.b16 %v303
    %v839 = vunpack.c.l.b16 %v304
    %v840 = vunpack.c.h.b16 %v304
    %v841 = vunpack.c.l.b16 %v305
    %v842 = vunpack.c.h.b16 %v305
    %v843 = vunpack.c.l.b16 %v306
    %v844 = vunpack.c.h.b16 %v306
    %v845 = vunpack.c.l.b16 %v307
    %v846 = vunpack.c.h.b16 %v307
    %v847 = vunpack.c.l.b16 %v308
    %v848 = vunpack.c.h.b16 %v308
    %v849 = vunpack.c.l.b16 %v309
    %v850 = vunpack.c.h.b16 %v309
    %v851 = vunpack.c.l.b16 %v310
    %v852 = vunpack.c.h.b16 %v310
    %v853 = vunpack.c.l.b16 %v311
    %v854 = vunpack.c.h.b16 %v311
    %v855 = vunpack.c.l.b16 %v312
    %v856 = vunpack.c.h.b16 %v312
    %v857 = vunpack.c.l.b16 %v313
    %v858 = vunpack.c.h.b16 %v313
    %v859 = vunpack.c.l.b16 %v314
    %v860 = vunpack.c.h.b16 %v314
    %v861 = vunpack.c.l.b16 %v315
    %v862 = vunpack.c.h.b16 %v315
    %v863 = vunpack.c.l.b16 %v316
    %v864 = vunpack.c.h.b16 %v316
    %v865 = vunpack.c.l.b16 %v317
    %v866 = vunpack.c.h.b16 %v317
    %v867 = vunpack.c.l.b16 %v318
    %v868 = vunpack.c.h.b16 %v318
    %v869 = vunpack.c.l.b16 %v319
    %v870 = vunpack.c.h.b16 %v319
    %v871 = vunpack.c.l.b16 %v320
    %v872 = vunpack.c.h.b16 %v320
    %v873 = vunpack.c.l.b16 %v321
    %v874 = vunpack.c.h.b16 %v321
    %v875 = vunpack.c.l.b16 %v322
    %v876 = vunpack.c.h.b16 %v322
    %v877 = vunpack.c.l.b16 %v323
    %v878 = vunpack.c.h.b16 %v323
    %v879 = vunpack.c.l.b16 %v324
    %v880 = vunpack.c.h.b16 %v324
    %v881 = vunpack.c.l.b16 %v325
    %v882 = vunpack.c.h.b16 %v325
    %v883 = vunpack.c.l.b16 %v326
    %v884 = vunpack.c.h.b16 %v326
    %v885 = vunpack.c.l.b16 %v327
    %v886 = vunpack.c.h.b16 %v327
    %v887 = vunpack.c.l.b16 %v328
    %v888 = vunpack.c.h.b16 %v328
    %v889 = vunpack.c.l.b16 %v329
    %v890 = vunpack.c.h.b16 %v329
    %v891 = vunpack.c.l.b16 %v330
    %v892 = vunpack.c.h.b16 %v330
    %v893 = vunpack.c.l.b16 %v331
    %v894 = vunpack.c.h.b16 %v331
    %v895 = vunpack.c.l.b16 %v332
    %v896 = vunpack.c.h.b16 %v332
    %v897 = vunpack.c.l.b16 %v333
    %v898 = vunpack.c.h.b16 %v333
    %v899 = vunpack.c.l.b16 %v334
    %v900 = vunpack.c.h.b16 %v334
    %v901 = vunpack.c.l.b16 %v335
    %v902 = vunpack.c.h.b16 %v335
    %v903 = vunpack.c.l.b16 %v336
    %v904 = vunpack.c.h.b16 %v336
    %v905 = vunpack.c.l.b16 %v337
    %v906 = vunpack.c.h.b16 %v337
    %v907 = vunpack.c.l.b16 %v338
    %v908 = vunpack.c.h.b16 %v338
    %v909 = vunpack.c.l.b16 %v339
    %v910 = vunpack.c.h.b16 %v339
    %v911 = vunpack.c.l.b16 %v340
    %v912 = vunpack.c.h.b16 %v340
    %v913 = vunpack.c.l.b16 %v341
    %v914 = vunpack.c.h.b16 %v341
    %v915 = vunpack.c.l.b16 %v342
    %v916 = vunpack.c.h.b16 %v342
    %v917 = vunpack.c.l.b16 %v343
    %v918 = vunpack.c.h.b16 %v343
    %v919 = vunpack.c.l.b16 %v344
    %v920 = vunpack.c.h.b16 %v344
    %v921 = vunpack.c.l.b16 %v345
    %v922 = vunpack.c.h.b16 %v345
    %v923 = vunpack.c.l.b16 %v346
    %v924 = vunpack.c.h.b16 %v346
    %v925 = vunpack.c.l.b16 %v347
    %v926 = vunpack.c.h.b16 %v347
    %v927 = vunpack.c.l.b16 %v348
    %v928 = vunpack.c.h.b16 %v348
    %v929 = vunpack.c.l.b16 %v349
    %v930 = vunpack.c.h.b16 %v349
    %v931 = vunpack.c.l.b16 %v350
    %v932 = vunpack.c.h.b16 %v350
    %v933 = vunpack.c.l.b16 %v351
    %v934 = vunpack.c.h.b16 %v351
    %v935 = vunpack.c.l.b16 %v352
    %v936 = vunpack.c.h.b16 %v352
    %v937 = vunpack.c.l.b16 %v353
    %v938 = vunpack.c.h.b16 %v353
    %v939 = vunpack.c.l.b16 %v354
    %v940 = vunpack.c.h.b16 %v354
    %v941 = vunpack.c.l.b16 %v355
    %v942 = vunpack.c.h.b16 %v355
    %v943 = vunpack.c.l.b16 %v356
    %v944 = vunpack.c.h.b16 %v356
    %v945 = vunpack.c.l.b16 %v357
    %v946 = vunpack.c.h.b16 %v357
    %v947 = vunpack.c.l.b16 %v358
    %v948 = vunpack.c.h.b16 %v358
    %v949 = vunpack.c.l.b16 %v359
    %v950 = vunpack.c.h.b16 %v359
    %v951 = vunpack.c.l.b16 %v360
    %v952 = vunpack.c.h.b16 %v360
    %v953 = vunpack.c.l.b16 %v361
    %v954 = vunpack.c.h.b16 %v361
    %v955 = vunpack.c.l.b16 %v362
    %v956 = vunpack.c.h.b16 %v362
    %v957 = vunpack.c.l.b16 %v363
    %v958 = vunpack.c.h.b16 %v363
    %v959 = vunpack.c.l.b16 %v364
    %v960 = vunpack.c.h.b16 %v364
    %v961 = vunpack.c.l.b16 %v365
    %v962 = vunpack.c.h.b16 %v365
    %v963 = vunpack.c.l.b16 %v366
    %v964 = vunpack.c.h.b16 %v366
    %v965 = vunpack.c.l.b16 %v367
    %v966 = vunpack.c.h.b16 %v367
    %v967 = vunpack.c.l.b16 %v368
    %v968 = vunpack.c.h.b16 %v368
    %v969 = vunpack.c.l.b16 %v369
    %v970 = vunpack.c.h.b16 %v369
    %v971 = vunpack.c.l.b16 %v370
    %v972 = vunpack.c.h.b16 %v370
    %v973 = vunpack.c.l.b16 %v371
    %v974 = vunpack.c.h.b16 %v371
    %v975 = vunpack.c.l.b16 %v372
    %v976 = vunpack.c.h.b16 %v372
    %v977 = vunpack.c.l.b16 %v373
    %v978 = vunpack.c.h.b16 %v373
    %v979 = vunpack.c.l.b16 %v374
    %v980 = vunpack.c.h.b16 %v374
    %v981 = vunpack.c.l.b16 %v375
    %v982 = vunpack.c.h.b16 %v375
    %v983 = vunpack.c.l.b16 %v376
    %v984 = vunpack.c.h.b16 %v376
    %v985 = vunpack.c.l.b16 %v377
    %v986 = vunpack.c.h.b16 %v377
    %v987 = vunpack.c.l.b16 %v378
    %v988 = vunpack.c.h.b16 %v378
    %v989 = vunpack.c.l.b16 %v379
    %v990 = vunpack.c.h.b16 %v379
    %v991 = vunpack.c.l.b16 %v380
    %v992 = vunpack.c.h.b16 %v380
    %v993 = vunpack.c.l.b16 %v381
    %v994 = vunpack.c.h.b16 %v381
    %v995 = vunpack.c.l.b16 %v382
    %v996 = vunpack.c.h.b16 %v382
    %v997 = vunpack.c.l.b16 %v383
    %v998 = vunpack.c.h.b16 %v383
    %v999 = vunpack.c.l.b16 %v384
    %v1000 = vunpack.c.h.b16 %v384
    %v1001 = vunpack.c.l.b16 %v385
    %v1002 = vunpack.c.h.b16 %v385
    %v1003 = vunpack.c.l.b16 %v386
    %v1004 = vunpack.c.h.b16 %v386
    %v1005 = vunpack.c.l.b16 %v387
    %v1006 = vunpack.c.h.b16 %v387
    %v1007 = vunpack.c.l.b16 %v388
    %v1008 = vunpack.c.h.b16 %v388
    %v1009 = vunpack.c.l.b16 %v389
    %v1010 = vunpack.c.h.b16 %v389
    %v1011 = vunpack.c.l.b16 %v390
    %v1012 = vunpack.c.h.b16 %v390
    %v1013 = vunpack.c.l.b16 %v391
    %v1014 = vunpack.c.h.b16 %v391
    %v1015 = vunpack.c.l.b16 %v392
    %v1016 = vunpack.c.h.b16 %v392
    %v1017 = vunpack.c.l.b16 %v393
    %v1018 = vunpack.c.h.b16 %v393
    %v1019 = vunpack.c.l.b16 %v394
    %v1020 = vunpack.c.h.b16 %v394
    %v1021 = vunpack.c.l.b16 %v395
    %v1022 = vunpack.c.h.b16 %v395
    %v1023 = vunpack.c.l.b16 %v396
    %v1024 = vunpack.c.h.b16 %v396
    %v1025 = vunpack.c.l.b16 %v397
    %v1026 = vunpack.c.h.b16 %v397
    %v1027 = vunpack.c.l.b16 %v398
    %v1028 = vunpack.c.h.b16 %v398
    %v1029 = vunpack.c.l.b16 %v399
    %v1030 = vunpack.c.h.b16 %v399
    %v1031 = vunpack.c.l.b16 %v400
    %v1032 = vunpack.c.h.b16 %v400
    %v1033 = vunpack.c.l.b16 %v401
    %v1034 = vunpack.c.h.b16 %v401
    %v1035 = vunpack.c.l.b16 %v402
    %v1036 = vunpack.c.h.b16 %v402
    %v1037 = vunpack.c.l.b16 %v403
    %v1038 = vunpack.c.h.b16 %v403
    %v1039 = vunpack.c.l.b16 %v404
    %v1040 = vunpack.c.h.b16 %v404
    %v1041 = vunpack.c.l.b16 %v405
    %v1042 = vunpack.c.h.b16 %v405
    %v1043 = vunpack.c.l.b16 %v406
    %v1044 = vunpack.c.h.b16 %v406
    %v1045 = vunpack.c.l.b16 %v407
    %v1046 = vunpack.c.h.b16 %v407
    %v1047 = vunpack.c.l.b16 %v408
    %v1048 = vunpack.c.h.b16 %v408
    %v1049 = vunpack.c.l.b16 %v409
    %v1050 = vunpack.c.h.b16 %v409
    %v1051 = vunpack.c.l.b16 %v410
    %v1052 = vunpack.c.h.b16 %v410
    %v1053 = vunpack.c.l.b16 %v411
    %v1054 = vunpack.c.h.b16 %v411
    %v1055 = vunpack.c.l.b16 %v412
    %v1056 = vunpack.c.h.b16 %v412
    %v1057 = vunpack.c.l.b16 %v413
    %v1058 = vunpack.c.h.b16 %v413
    %v1059 = vunpack.c.l.b16 %v414
    %v1060 = vunpack.c.h.b16 %v414
    %v1061 = vunpack.c.l.b16 %v415
    %v1062 = vunpack.c.h.b16 %v415
    %v1063 = vunpack.c.l.b16 %v416
    %v1064 = vunpack.c.h.b16 %v416
    %v1065 = vunpack.c.l.b16 %v417
    %v1066 = vunpack.c.h.b16 %v417
    %v1067 = vunpack.c.l.b16 %v418
    %v1068 = vunpack.c.h.b16 %v418
    %v1069 = vunpack.c.l.b16 %v419
    %v1070 = vunpack.c.h.b16 %v419
    %v1071 = vunpack.c.l.b16 %v420
    %v1072 = vunpack.c.h.b16 %v420
    %v1073 = vunpack.c.l.b16 %v421
    %v1074 = vunpack.c.h.b16 %v421
    %v1075 = vunpack.c.l.b16 %v422
    %v1076 = vunpack.c.h.b16 %v422
    %v1077 = vunpack.c.l.b16 %v423
    %v1078 = vunpack.c.h.b16 %v423
    %v1079 = vunpack.c.l.b16 %v424
    %v1080 = vunpack.c.h.b16 %v424
    %v1081 = vunpack.c.l.b16 %v425
    %v1082 = vunpack.c.h.b16 %v425
    %v1083 = vunpack.c.l.b16 %v426
    %v1084 = vunpack.c.h.b16 %v426
    %v1085 = vunpack.c.l.b16 %v427
    %v1086 = vunpack.c.h.b16 %v427
    %v1087 = vunpack.c.l.b16 %v428
    %v1088 = vunpack.c.h.b16 %v428
    %v1089 = vunpack.c.l.b16 %v429
    %v1090 = vunpack.c.h.b16 %v429
    %v1091 = vunpack.c.l.b16 %v430
    %v1092 = vunpack.c.h.b16 %v430
    %v1093 = vunpack.c.l.b16 %v431
    %v1094 = vunpack.c.h.b16 %v431
    %v1095 = vunpack.c.l.b16 %v432
    %v1096 = vunpack.c.h.b16 %v432
    %v1097 = vunpack.c.l.b16 %v433
    %v1098 = vunpack.c.h.b16 %v433
    %v1099 = vunpack.c.l.b16 %v434
    %v1100 = vunpack.c.h.b16 %v434
    %v1101 = vunpack.c.l.b16 %v435
    %v1102 = vunpack.c.h.b16 %v435
    %v1103 = vunpack.c.l.b16 %v436
    %v1104 = vunpack.c.h.b16 %v436
    %v1105 = vunpack.c.l.b16 %v437
    %v1106 = vunpack.c.h.b16 %v437
    %v1107 = vunpack.c.l.b16 %v438
    %v1108 = vunpack.c.h.b16 %v438
    %v1109 = vunpack.c.l.b16 %v439
    %v1110 = vunpack.c.h.b16 %v439
    %v1111 = vunpack.c.l.b16 %v440
    %v1112 = vunpack.c.h.b16 %v440
    %v1113 = vunpack.c.l.b16 %v441
    %v1114 = vunpack.c.h.b16 %v441
    %v1115 = vunpack.c.l.b16 %v442
    %v1116 = vunpack.c.h.b16 %v442
    %v1117 = vunpack.c.l.b16 %v443
    %v1118 = vunpack.c.h.b16 %v443
    %v1119 = vunpack.c.l.b16 %v444
    %v1120 = vunpack.c.h.b16 %v444
    %v1121 = vunpack.c.l.b16 %v445
    %v1122 = vunpack.c.h.b16 %v445
    %v1123 = vunpack.c.l.b16 %v446
    %v1124 = vunpack.c.h.b16 %v446
    %v1125 = vunpack.c.l.b16 %v447
    %v1126 = vunpack.c.h.b16 %v447
    %v1127 = vunpack.c.l.b16 %v448
    %v1128 = vunpack.c.h.b16 %v448
    %v1129 = vunpack.c.l.b16 %v449
    %v1130 = vunpack.c.h.b16 %v449
    %v1131 = vunpack.c.l.b16 %v450
    %v1132 = vunpack.c.h.b16 %v450
    %v1133 = vunpack.c.l.b16 %v451
    %v1134 = vunpack.c.h.b16 %v451
    %v1135 = vunpack.c.l.b16 %v452
    %v1136 = vunpack.c.h.b16 %v452
    %v1137 = vunpack.c.l.b16 %v453
    %v1138 = vunpack.c.h.b16 %v453
    %v1139 = vunpack.c.l.b16 %v454
    %v1140 = vunpack.c.h.b16 %v454
    %v1141 = vunpack.c.l.b16 %v455
    %v1142 = vunpack.c.h.b16 %v455
    %v1143 = vunpack.c.l.b16 %v456
    %v1144 = vunpack.c.h.b16 %v456
    %v1145 = vunpack.c.l.b16 %v457
    %v1146 = vunpack.c.h.b16 %v457
    %v1147 = vunpack.c.l.b16 %v458
    %v1148 = vunpack.c.h.b16 %v458
    %v1149 = vunpack.c.l.b16 %v459
    %v1150 = vunpack.c.h.b16 %v459
    %v1151 = vunpack.c.l.b16 %v460
    %v1152 = vunpack.c.h.b16 %v460
    %v1153 = vunpack.c.l.b16 %v461
    %v1154 = vunpack.c.h.b16 %v461
    %v1155 = vunpack.c.l.b16 %v462
    %v1156 = vunpack.c.h.b16 %v462
    %v1157 = vunpack.c.l.b16 %v463
    %v1158 = vunpack.c.h.b16 %v463
    %v1159 = vunpack.c.l.b16 %v464
    %v1160 = vunpack.c.h.b16 %v464
    %v1161 = vunpack.c.l.b16 %v465
    %v1162 = vunpack.c.h.b16 %v465
    %v1163 = vunpack.c.l.b16 %v466
    %v1164 = vunpack.c.h.b16 %v466
    %v1165 = vunpack.c.l.b16 %v467
    %v1166 = vunpack.c.h.b16 %v467
    %v1167 = vunpack.c.l.b16 %v468
    %v1168 = vunpack.c.h.b16 %v468
    %v1169 = vunpack.c.l.b16 %v469
    %v1170 = vunpack.c.h.b16 %v469
    %v1171 = vunpack.c.l.b16 %v470
    %v1172 = vunpack.c.h.b16 %v470
    %v1173 = vunpack.c.l.b16 %v471
    %v1174 = vunpack.c.h.b16 %v471
    %v1175 = vunpack.c.l.b16 %v472
    %v1176 = vunpack.c.h.b16 %v472
    %v1177 = vunpack.c.l.b16 %v473
    %v1178 = vunpack.c.h.b16 %v473
    %v1179 = vunpack.c.l.b16 %v474
    %v1180 = vunpack.c.h.b16 %v474
    %v1181 = vunpack.c.l.b16 %v475
    %v1182 = vunpack.c.h.b16 %v475
    %v1183 = vunpack.c.l.b16 %v476
    %v1184 = vunpack.c.h.b16 %v476
    %v1185 = vunpack.c.l.b16 %v477
    %v1186 = vunpack.c.h.b16 %v477
    %v1187 = vunpack.c.l.b16 %v478
    %v1188 = vunpack.c.h.b16 %v478
    %v1189 = vunpack.c.l.b16 %v479
    %v1190 = vunpack.c.h.b16 %v479
    %v1191 = vunpack.c.l.b16 %v480
    %v1192 = vunpack.c.h.b16 %v480
    %v1193 = vunpack.c.l.b16 %v481
    %v1194 = vunpack.c.h.b16 %v481
    %v1195 = vunpack.c.l.b16 %v482
    %v1196 = vunpack.c.h.b16 %v482
    %v1197 = vunpack.c.l.b16 %v483
    %v1198 = vunpack.c.h.b16 %v483
    %v1199 = vunpack.c.l.b16 %v484
    %v1200 = vunpack.c.h.b16 %v484
    %v1201 = vunpack.c.l.b16 %v485
    %v1202 = vunpack.c.h.b16 %v485
    %v1203 = vunpack.c.l.b16 %v486
    %v1204 = vunpack.c.h.b16 %v486
    %v1205 = vunpack.c.l.b16 %v487
    %v1206 = vunpack.c.h.b16 %v487
    %v1207 = vunpack.c.l.b16 %v488
    %v1208 = vunpack.c.h.b16 %v488
    %v1209 = vunpack.c.l.b16 %v489
    %v1210 = vunpack.c.h.b16 %v489
    %v1211 = vunpack.c.l.b16 %v490
    %v1212 = vunpack.c.h.b16 %v490
    %v1213 = vunpack.c.l.b16 %v491
    %v1214 = vunpack.c.h.b16 %v491
    %v1215 = vunpack.c.l.b16 %v492
    %v1216 = vunpack.c.h.b16 %v492
    %v1217 = vunpack.c.l.b16 %v493
    %v1218 = vunpack.c.h.b16 %v493
    %v1219 = vunpack.c.l.b16 %v494
    %v1220 = vunpack.c.h.b16 %v494
    %v1221 = vunpack.c.l.b16 %v495
    %v1222 = vunpack.c.h.b16 %v495
    %v1223 = vunpack.c.l.b16 %v496
    %v1224 = vunpack.c.h.b16 %v496
    %v1225 = vunpack.c.l.b16 %v497
    %v1226 = vunpack.c.h.b16 %v497
    %v1227 = vunpack.c.l.b16 %v498
    %v1228 = vunpack.c.h.b16 %v498
    %v1229 = vunpack.c.l.b16 %v499
    %v1230 = vunpack.c.h.b16 %v499
    %v1231 = vunpack.c.l.b16 %v500
    %v1232 = vunpack.c.h.b16 %v500
    %v1233 = vunpack.c.l.b16 %v501
    %v1234 = vunpack.c.h.b16 %v501
    %v1235 = vunpack.c.l.b16 %v502
    %v1236 = vunpack.c.h.b16 %v502
    %v1237 = vunpack.c.l.b16 %v503
    %v1238 = vunpack.c.h.b16 %v503
    %v1239 = vunpack.c.l.b16 %v504
    %v1240 = vunpack.c.h.b16 %v504
    %v1241 = vunpack.c.l.b16 %v505
    %v1242 = vunpack.c.h.b16 %v505
    %v1243 = vunpack.c.l.b16 %v506
    %v1244 = vunpack.c.h.b16 %v506
    %v1245 = vunpack.c.l.b16 %v507
    %v1246 = vunpack.c.h.b16 %v507
    %v1247 = vunpack.c.l.b16 %v508
    %v1248 = vunpack.c.h.b16 %v508
    %v1249 = vunpack.c.l.b16 %v509
    %v1250 = vunpack.c.h.b16 %v509
    %v1251 = vunpack.c.l.b16 %v510
    %v1252 = vunpack.c.h.b16 %v510
    %v1253 = vunpack.c.l.b16 %v511
    %v1254 = vunpack.c.h.b16 %v511
    %v1255 = vunpack.c.l.b16 %v512
    %v1256 = vunpack.c.h.b16 %v512
    %v1257 = vunpack.c.l.b16 %v513
    %v1258 = vunpack.c.h.b16 %v513
    %v1259 = vunpack.c.l.b16 %v514
    %v1260 = vunpack.c.h.b16 %v514
    %v1261 = vunpack.c.l.b16 %v515
    %v1262 = vunpack.c.h.b16 %v515
    %v1263 = vunpack.c.l.b16 %v516
    %v1264 = vunpack.c.h.b16 %v516
    %v1265 = vunpack.c.l.b16 %v517
    %v1266 = vunpack.c.h.b16 %v517
    %v1267 = vunpack.c.l.b16 %v518
    %v1268 = vunpack.c.h.b16 %v518
    %v1269 = vunpack.c.l.b16 %v519
    %v1270 = vunpack.c.h.b16 %v519
    %v1271 = vunpack.c.l.b16 %v520
    %v1272 = vunpack.c.h.b16 %v520
    %v1273 = vunpack.c.l.b16 %v521
    %v1274 = vunpack.c.h.b16 %v521
    %v1275 = vunpack.c.l.b16 %v522
    %v1276 = vunpack.c.h.b16 %v522
    %v1277 = vunpack.c.l.b16 %v523
    %v1278 = vunpack.c.h.b16 %v523
    %v1279 = vunpack.c.l.b16 %v524
    %v1280 = vunpack.c.h.b16 %v524
    %v1281 = vunpack.c.l.b16 %v525
    %v1282 = vunpack.c.h.b16 %v525
    %v1283 = vunpack.c.l.b16 %v526
    %v1284 = vunpack.c.h.b16 %v526
    %v1285 = vunpack.c.l.b16 %v527
    %v1286 = vunpack.c.h.b16 %v527
    %v1287 = vunpack.c.l.b16 %v528
    %v1288 = vunpack.c.h.b16 %v528
    %v1289 = vunpack.c.l.b16 %v529
    %v1290 = vunpack.c.h.b16 %v529
    %v1291 = vunpack.c.l.b16 %v530
    %v1292 = vunpack.c.h.b16 %v530
    %v1293 = vunpack.c.l.b16 %v531
    %v1294 = vunpack.c.h.b16 %v531
    %v1295 = vunpack.c.l.b16 %v532
    %v1296 = vunpack.c.h.b16 %v532
    %v1297 = vunpack.c.l.b16 %v533
    %v1298 = vunpack.c.h.b16 %v533
    %v1299 = vunpack.c.l.b16 %v534
    %v1300 = vunpack.c.h.b16 %v534
    %v1301 = vunpack.c.l.b16 %v535
    %v1302 = vunpack.c.h.b16 %v535
    %v1303 = vunpack.c.l.b16 %v536
    %v1304 = vunpack.c.h.b16 %v536
    %v1305 = vunpack.c.l.b16 %v537
    %v1306 = vunpack.c.h.b16 %v537
    %v1307 = vunpack.c.l.b16 %v538
    %v1308 = vunpack.c.h.b16 %v538
    %v1309 = vunpack.c.l.b16 %v539
    %v1310 = vunpack.c.h.b16 %v539
    %v1311 = vunpack.c.l.b16 %v540
    %v1312 = vunpack.c.h.b16 %v540
    %v1313 = vunpack.c.l.b16 %v541
    %v1314 = vunpack.c.h.b16 %v541
    %v1315 = vunpack.c.l.b16 %v542
    %v1316 = vunpack.c.h.b16 %v542
    %v1317 = vunpack.c.l.b16 %v543
    %v1318 = vunpack.c.h.b16 %v543
    %v1319 = vunpack.c.l.b16 %v544
    %v1320 = vunpack.c.h.b16 %v544
    %v1321 = vunpack.c.l.b16 %v545
    %v1322 = vunpack.c.h.b16 %v545
    %v1323 = vunpack.c.l.b16 %v546
    %v1324 = vunpack.c.h.b16 %v546
    %v1325 = vpack.c.b16 %v817, %v813
    %v1326 = vpack.c.b16 %v818, %v814
    %v1327 = vpack.c.b16 %v819, %v815
    %v1328 = vpack.c.b16 %v820, %v816
    %v1329 = vpack.c.b16 %v825, %v821
    %v1330 = vpack.c.b16 %v826, %v822
    %v1331 = vpack.c.b16 %v827, %v823
    %v1332 = vpack.c.b16 %v828, %v824
    %v1333 = vpack.c.b16 %v833, %v829
    %v1334 = vpack.c.b16 %v834, %v830
    %v1335 = vpack.c.b16 %v835, %v831
    %v1336 = vpack.c.b16 %v836, %v832
    %v1337 = vpack.c.b16 %v841, %v837
    %v1338 = vpack.c.b16 %v842, %v838
    %v1339 = vpack.c.b16 %v843, %v839
    %v1340 = vpack.c.b16 %v844, %v840
    %v1341 = vpack.c.b16 %v849, %v845
    %v1342 = vpack.c.b16 %v850, %v846
    %v1343 = vpack.c.b16 %v851, %v847
    %v1344 = vpack.c.b16 %v852, %v848
    %v1345 = vpack.c.b16 %v857, %v853
    %v1346 = vpack.c.b16 %v858, %v854
    %v1347 = vpack.c.b16 %v859, %v855
    %v1348 = vpack.c.b16 %v860, %v856
    %v1349 = vpack.c.b16 %v865, %v861
    %v1350 = vpack.c.b16 %v866, %v862
    %v1351 = vpack.c.b16 %v867, %v863
    %v1352 = vpack.c.b16 %v868, %v864
    %v1353 = vpack.c.b16 %v873, %v869
    %v1354 = vpack.c.b16 %v874, %v870
    %v1355 = vpack.c.b16 %v875, %v871
    %v1356 = vpack.c.b16 %v876, %v872
    %v1357 = vpack.c.b16 %v881, %v877
    %v1358 = vpack.c.b16 %v882, %v878
    %v1359 = vpack.c.b16 %v883, %v879
    %v1360 = vpack.c.b16 %v884, %v880
    %v1361 = vpack.c.b16 %v889, %v885
    %v1362 = vpack.c.b16 %v890, %v886
    %v1363 = vpack.c.b16 %v891, %v887
    %v1364 = vpack.c.b16 %v892, %v888
    %v1365 = vpack.c.b16 %v897, %v893
    %v1366 = vpack.c.b16 %v898, %v894
    %v1367 = vpack.c.b16 %v899, %v895
    %v1368 = vpack.c.b16 %v900, %v896
    %v1369 = vpack.c.b16 %v905, %v901
    %v1370 = vpack.c.b16 %v906, %v902
    %v1371 = vpack.c.b16 %v907, %v903
    %v1372 = vpack.c.b16 %v908, %v904
    %v1373 = vpack.c.b16 %v913, %v909
    %v1374 = vpack.c.b16 %v914, %v910
    %v1375 = vpack.c.b16 %v915, %v911
    %v1376 = vpack.c.b16 %v916, %v912
    %v1377 = vpack.c.b16 %v921, %v917
    %v1378 = vpack.c.b16 %v922, %v918
    %v1379 = vpack.c.b16 %v923, %v919
    %v1380 = vpack.c.b16 %v924, %v920
    %v1381 = vpack.c.b16 %v929, %v925
    %v1382 = vpack.c.b16 %v930, %v926
    %v1383 = vpack.c.b16 %v931, %v927
    %v1384 = vpack.c.b16 %v932, %v928
    %v1385 = vpack.c.b16 %v937, %v933
    %v1386 = vpack.c.b16 %v938, %v934
    %v1387 = vpack.c.b16 %v939, %v935
    %v1388 = vpack.c.b16 %v940, %v936
    %v1389 = vpack.c.b16 %v945, %v941
    %v1390 = vpack.c.b16 %v946, %v942
    %v1391 = vpack.c.b16 %v947, %v943
    %v1392 = vpack.c.b16 %v948, %v944
    %v1393 = vpack.c.b16 %v953, %v949
    %v1394 = vpack.c.b16 %v954, %v950
    %v1395 = vpack.c.b16 %v955, %v951
    %v1396 = vpack.c.b16 %v956, %v952
    %v1397 = vpack.c.b16 %v961, %v957
    %v1398 = vpack.c.b16 %v962, %v958
    %v1399 = vpack.c.b16 %v963, %v959
    %v1400 = vpack.c.b16 %v964, %v960
    %v1401 = vpack.c.b16 %v969, %v965
    %v1402 = vpack.c.b16 %v970, %v966
    %v1403 = vpack.c.b16 %v971, %v967
    %v1404 = vpack.c.b16 %v972, %v968
    %v1405 = vpack.c.b16 %v977, %v973
    %v1406 = vpack.c.b16 %v978, %v974
    %v1407 = vpack.c.b16 %v979, %v975
    %v1408 = vpack.c.b16 %v980, %v976
    %v1409 = vpack.c.b16 %v985, %v981
    %v1410 = vpack.c.b16 %v986, %v982
    %v1411 = vpack.c.b16 %v987, %v983
    %v1412 = vpack.c.b16 %v988, %v984
    %v1413 = vpack.c.b16 %v993, %v989
    %v1414 = vpack.c.b16 %v994, %v990
    %v1415 = vpack.c.b16 %v995, %v991
    %v1416 = vpack.c.b16 %v996, %v992
    %v1417 = vpack.c.b16 %v1001, %v997
    %v1418 = vpack.c.b16 %v1002, %v998
    %v1419 = vpack.c.b16 %v1003, %v999
    %v1420 = vpack.c.b16 %v1004, %v1000
    %v1421 = vpack.c.b16 %v1009, %v1005
    %v1422 = vpack.c.b16 %v1010, %v1006
    %v1423 = vpack.c.b16 %v1011, %v1007
    %v1424 = vpack.c.b16 %v1012, %v1008
    %v1425 = vpack.c.b16 %v1017, %v1013
    %v1426 = vpack.c.b16 %v1018, %v1014
    %v1427 = vpack.c.b16 %v1019, %v1015
    %v1428 = vpack.c.b16 %v1020, %v1016
    %v1429 = vpack.c.b16 %v1025, %v1021
    %v1430 = vpack.c.b16 %v1026, %v1022
    %v1431 = vpack.c.b16 %v1027, %v1023
    %v1432 = vpack.c.b16 %v1028, %v1024
    %v1433 = vpack.c.b16 %v1033, %v1029
    %v1434 = vpack.c.b16 %v1034, %v1030
    %v1435 = vpack.c.b16 %v1035, %v1031
    %v1436 = vpack.c.b16 %v1036, %v1032
    %v1437 = vpack.c.b16 %v1041, %v1037
    %v1438 = vpack.c.b16 %v1042, %v1038
    %v1439 = vpack.c.b16 %v1043, %v1039
    %v1440 = vpack.c.b16 %v1044, %v1040
    %v1441 = vpack.c.b16 %v1049, %v1045
    %v1442 = vpack.c.b16 %v1050, %v1046
    %v1443 = vpack.c.b16 %v1051, %v1047
    %v1444 = vpack.c.b16 %v1052, %v1048
    %v1445 = vpack.c.b16 %v1057, %v1053
    %v1446 = vpack.c.b16 %v1058, %v1054
    %v1447 = vpack.c.b16 %v1059, %v1055
    %v1448 = vpack.c.b16 %v1060, %v1056
    %v1449 = vpack.c.b16 %v1065, %v1061
    %v1450 = vpack.c.b16 %v1066, %v1062
    %v1451 = vpack.c.b16 %v1067, %v1063
    %v1452 = vpack.c.b16 %v1068, %v1064
    %v1453 = vpack.c.b16 %v1073, %v1069
    %v1454 = vpack.c.b16 %v1074, %v1070
    %v1455 = vpack.c.b16 %v1075, %v1071
    %v1456 = vpack.c.b16 %v1076, %v1072
    %v1457 = vpack.c.b16 %v1081, %v1077
    %v1458 = vpack.c.b16 %v1082, %v1078
    %v1459 = vpack.c.b16 %v1083, %v1079
    %v1460 = vpack.c.b16 %v1084, %v1080
    %v1461 = vpack.c.b16 %v1089, %v1085
    %v1462 = vpack.c.b16 %v1090, %v1086
    %v1463 = vpack.c.b16 %v1091, %v1087
    %v1464 = vpack.c.b16 %v1092, %v1088
    %v1465 = vpack.c.b16 %v1097, %v1093
    %v1466 = vpack.c.b16 %v1098, %v1094
    %v1467 = vpack.c.b16 %v1099, %v1095
    %v1468 = vpack.c.b16 %v1100, %v1096
    %v1469 = vpack.c.b16 %v1105, %v1101
    %v1470 = vpack.c.b16 %v1106, %v1102
    %v1471 = vpack.c.b16 %v1107, %v1103
    %v1472 = vpack.c.b16 %v1108, %v1104
    %v1473 = vpack.c.b16 %v1113, %v1109
    %v1474 = vpack.c.b16 %v1114, %v1110
    %v1475 = vpack.c.b16 %v1115, %v1111
    %v1476 = vpack.c.b16 %v1116, %v1112
    %v1477 = vpack.c.b16 %v1121, %v1117
    %v1478 = vpack.c.b16 %v1122, %v1118
    %v1479 = vpack.c.b16 %v1123, %v1119
    %v1480 = vpack.c.b16 %v1124, %v1120
    %v1481 = vpack.c.b16 %v1129, %v1125
    %v1482 = vpack.c.b16 %v1130, %v1126
    %v1483 = vpack.c.b16 %v1131, %v1127
    %v1484 = vpack.c.b16 %v1132, %v1128
    %v1485 = vpack.c.b16 %v1137, %v1133
    %v1486 = vpack.c.b16 %v1138, %v1134
    %v1487 = vpack.c.b16 %v1139, %v1135
    %v1488 = vpack.c.b16 %v1140, %v1136
    %v1489 = vpack.c.b16 %v1145, %v1141
    %v1490 = vpack.c.b16 %v1146, %v1142
    %v1491 = vpack.c.b16 %v1147, %v1143
    %v1492 = vpack.c.b16 %v1148, %v1144
    %v1493 = vpack.c.b16 %v1153, %v1149
    %v1494 = vpack.c.b16 %v1154, %v1150
    %v1495 = vpack.c.b16 %v1155, %v1151
    %v1496 = vpack.c.b16 %v1156, %v1152
    %v1497 = vpack.c.b16 %v1161, %v1157
    %v1498 = vpack.c.b16 %v1162, %v1158
    %v1499 = vpack.c.b16 %v1163, %v1159
    %v1500 = vpack.c.b16 %v1164, %v1160
    %v1501 = vpack.c.b16 %v1169, %v1165
    %v1502 = vpack.c.b16 %v1170, %v1166
    %v1503 = vpack.c.b16 %v1171, %v1167
    %v1504 = vpack.c.b16 %v1172, %v1168
    %v1505 = vpack.c.b16 %v1177, %v1173
    %v1506 = vpack.c.b16 %v1178, %v1174
    %v1507 = vpack.c.b16 %v1179, %v1175
    %v1508 = vpack.c.b16 %v1180, %v1176
    %v1509 = vpack.c.b16 %v1185, %v1181
    %v1510 = vpack.c.b16 %v1186, %v1182
    %v1511 = vpack.c.b16 %v1187, %v1183
    %v1512 = vpack.c.b16 %v1188, %v1184
    %v1513 = vpack.c.b16 %v1193, %v1189
    %v1514 = vpack.c.b16 %v1194, %v1190
    %v1515 = vpack.c.b16 %v1195, %v1191
    %v1516 = vpack.c.b16 %v1196, %v1192
    %v1517 = vpack.c.b16 %v1201, %v1197
    %v1518 = vpack.c.b16 %v1202, %v1198
    %v1519 = vpack.c.b16 %v1203, %v1199
    %v1520 = vpack.c.b16 %v1204, %v1200
    %v1521 = vpack.c.b16 %v1209, %v1205
    %v1522 = vpack.c.b16 %v1210, %v1206
    %v1523 = vpack.c.b16 %v1211, %v1207
    %v1524 = vpack.c.b16 %v1212, %v1208
    %v1525 = vpack.c.b16 %v1217, %v1213
    %v1526 = vpack.c.b16 %v1218, %v1214
    %v1527 = vpack.c.b16 %v1219, %v1215
    %v1528 = vpack.c.b16 %v1220, %v1216
    %v1529 = vpack.c.b16 %v1225, %v1221
    %v1530 = vpack.c.b16 %v1226, %v1222
    %v1531 = vpack.c.b16 %v1227, %v1223
    %v1532 = vpack.c.b16 %v1228, %v1224
    %v1533 = vpack.c.b16 %v1233, %v1229
    %v1534 = vpack.c.b16 %v1234, %v1230
    %v1535 = vpack.c.b16 %v1235, %v1231
    %v1536 = vpack.c.b16 %v1236, %v1232
    %v1537 = vpack.c.b16 %v1241, %v1237
    %v1538 = vpack.c.b16 %v1242, %v1238
    %v1539 = vpack.c.b16 %v1243, %v1239
    %v1540 = vpack.c.b16 %v1244, %v1240
    %v1541 = vpack.c.b16 %v1249, %v1245
    %v1542 = vpack.c.b16 %v1250, %v1246
    %v1543 = vpack.c.b16 %v1251, %v1247
    %v1544 = vpack.c.b16 %v1252, %v1248
    %v1545 = vpack.c.b16 %v1257, %v1253
    %v1546 = vpack.c.b16 %v1258, %v1254
    %v1547 = vpack.c.b16 %v1259, %v1255
    %v1548 = vpack.c.b16 %v1260, %v1256
    %v1549 = vpack.c.b16 %v1265, %v1261
    %v1550 = vpack.c.b16 %v1266, %v1262
    %v1551 = vpack.c.b16 %v1267, %v1263
    %v1552 = vpack.c.b16 %v1268, %v1264
    %v1553 = vpack.c.b16 %v1273, %v1269
    %v1554 = vpack.c.b16 %v1274, %v1270
    %v1555 = vpack.c.b16 %v1275, %v1271
    %v1556 = vpack.c.b16 %v1276, %v1272
    %v1557 = vpack.c.b16 %v1281, %v1277
    %v1558 = vpack.c.b16 %v1282, %v1278
    %v1559 = vpack.c.b16 %v1283, %v1279
    %v1560 = vpack.c.b16 %v1284, %v1280
    %v1561 = vpack.c.b16 %v1289, %v1285
    %v1562 = vpack.c.b16 %v1290, %v1286
    %v1563 = vpack.c.b16 %v1291, %v1287
    %v1564 = vpack.c.b16 %v1292, %v1288
    %v1565 = vpack.c.b16 %v1297, %v1293
    %v1566 = vpack.c.b16 %v1298, %v1294
    %v1567 = vpack.c.b16 %v1299, %v1295
    %v1568 = vpack.c.b16 %v1300, %v1296
    %v1569 = vpack.c.b16 %v1305, %v1301
    %v1570 = vpack.c.b16 %v1306, %v1302
    %v1571 = vpack.c.b16 %v1307, %v1303
    %v1572 = vpack.c.b16 %v1308, %v1304
    %v1573 = vpack.c.b16 %v1313, %v1309
    %v1574 = vpack.c.b16 %v1314, %v1310
    %v1575 = vpack.c.b16 %v1315, %v1311
    %v1576 = vpack.c.b16 %v1316, %v1312
    %v1577 = vpack.c.b16 %v1321, %v1317
    %v1578 = vpack.c.b16 %v1322, %v1318
    %v1579 = vpack.c.b16 %v1323, %v1319
    %v1580 = vpack.c.b16 %v1324, %v1320
    %1837 = vmatpush.bf16.msra.mxu0 %v1353
    %1838 = vmatpush.bf16.msra.mxu0 %v1349
    %1839 = vmatpush.bf16.msra.mxu0 %v1345
    %1840 = vmatpush.bf16.msra.mxu0 %v1341
    %1841 = vmatpush.bf16.msra.mxu0 %v1337
    %1842 = vmatpush.bf16.msra.mxu0 %v1333
    %1843 = vmatpush.bf16.msra.mxu0 %v1329
    %1844 = vmatpush.bf16.msra.mxu0 %v1325
    %1845 = vmatmul.bf16.gmra.mxu0 %v283
    %v1846 = vpop.f32.mrf.mxu0
    %v1847 = vadd.f32 %v549, %v1846
    %v1848 = vpop.f32.mrf.mxu0
    %1849 = vdwg.mxu0
    %1850 = vmatpush.bf16.msra.mxu0 %v1385
    %1851 = vmatpush.bf16.msra.mxu0 %v1381
    %1852 = vmatpush.bf16.msra.mxu0 %v1377
    %1853 = vmatpush.bf16.msra.mxu0 %v1373
    %1854 = vmatpush.bf16.msra.mxu0 %v1369
    %1855 = vmatpush.bf16.msra.mxu0 %v1365
    %1856 = vmatpush.bf16.msra.mxu0 %v1361
    %1857 = vmatpush.bf16.msra.mxu0 %v1357
    %1858 = vmatmul.bf16.gmra.mxu0 %v284
    %v1859 = vpop.f32.mrf.mxu0
    %v1860 = vadd.f32 %v1847, %v1859
    %v1861 = vpop.f32.mrf.mxu0
    %1862 = vdwg.mxu0
    %1863 = vmatpush.bf16.msra.mxu0 %v1417
    %1864 = vmatpush.bf16.msra.mxu0 %v1413
    %1865 = vmatpush.bf16.msra.mxu0 %v1409
    %1866 = vmatpush.bf16.msra.mxu0 %v1405
    %1867 = vmatpush.bf16.msra.mxu0 %v1401
    %1868 = vmatpush.bf16.msra.mxu0 %v1397
    %1869 = vmatpush.bf16.msra.mxu0 %v1393
    %1870 = vmatpush.bf16.msra.mxu0 %v1389
    %1871 = vmatmul.bf16.gmra.mxu0 %v285
    %v1872 = vpop.f32.mrf.mxu0
    %v1873 = vadd.f32 %v1860, %v1872
    %v1874 = vpop.f32.mrf.mxu0
    %1875 = vdwg.mxu0
    %1876 = vmatpush.bf16.msra.mxu0 %v1449
    %1877 = vmatpush.bf16.msra.mxu0 %v1445
    %1878 = vmatpush.bf16.msra.mxu0 %v1441
    %1879 = vmatpush.bf16.msra.mxu0 %v1437
    %1880 = vmatpush.bf16.msra.mxu0 %v1433
    %1881 = vmatpush.bf16.msra.mxu0 %v1429
    %1882 = vmatpush.bf16.msra.mxu0 %v1425
    %1883 = vmatpush.bf16.msra.mxu0 %v1421
    %1884 = vmatmul.bf16.gmra.mxu0 %v286
    %v1885 = vpop.f32.mrf.mxu0
    %v1886 = vadd.f32 %v1873, %v1885
    %v1887 = vpop.f32.mrf.mxu0
    %1888 = vdwg.mxu0
    %1889 = vmatpush.bf16.msra.mxu0 %v1481
    %1890 = vmatpush.bf16.msra.mxu0 %v1477
    %1891 = vmatpush.bf16.msra.mxu0 %v1473
    %1892 = vmatpush.bf16.msra.mxu0 %v1469
    %1893 = vmatpush.bf16.msra.mxu0 %v1465
    %1894 = vmatpush.bf16.msra.mxu0 %v1461
    %1895 = vmatpush.bf16.msra.mxu0 %v1457
    %1896 = vmatpush.bf16.msra.mxu0 %v1453
    %1897 = vmatmul.bf16.gmra.mxu0 %v287
    %v1898 = vpop.f32.mrf.mxu0
    %v1899 = vadd.f32 %v1886, %v1898
    %v1900 = vpop.f32.mrf.mxu0
    %1901 = vdwg.mxu0
    %1902 = vmatpush.bf16.msra.mxu0 %v1513
    %1903 = vmatpush.bf16.msra.mxu0 %v1509
    %1904 = vmatpush.bf16.msra.mxu0 %v1505
    %1905 = vmatpush.bf16.msra.mxu0 %v1501
    %1906 = vmatpush.bf16.msra.mxu0 %v1497
    %1907 = vmatpush.bf16.msra.mxu0 %v1493
    %1908 = vmatpush.bf16.msra.mxu0 %v1489
    %1909 = vmatpush.bf16.msra.mxu0 %v1485
    %1910 = vmatmul.bf16.gmra.mxu0 %v288
    %v1911 = vpop.f32.mrf.mxu0
    %v1912 = vadd.f32 %v1899, %v1911
    %v1913 = vpop.f32.mrf.mxu0
    %1914 = vdwg.mxu0
    %1915 = vmatpush.bf16.msra.mxu0 %v1545
    %1916 = vmatpush.bf16.msra.mxu0 %v1541
    %1917 = vmatpush.bf16.msra.mxu0 %v1537
    %1918 = vmatpush.bf16.msra.mxu0 %v1533
    %1919 = vmatpush.bf16.msra.mxu0 %v1529
    %1920 = vmatpush.bf16.msra.mxu0 %v1525
    %1921 = vmatpush.bf16.msra.mxu0 %v1521
    %1922 = vmatpush.bf16.msra.mxu0 %v1517
    %1923 = vmatmul.bf16.gmra.mxu0 %v289
    %v1924 = vpop.f32.mrf.mxu0
    %v1925 = vadd.f32 %v1912, %v1924
    %v1926 = vpop.f32.mrf.mxu0
    %1927 = vdwg.mxu0
    %1928 = vmatpush.bf16.msra.mxu0 %v1577
    %1929 = vmatpush.bf16.msra.mxu0 %v1573
    %1930 = vmatpush.bf16.msra.mxu0 %v1569
    %1931 = vmatpush.bf16.msra.mxu0 %v1565
    %1932 = vmatpush.bf16.msra.mxu0 %v1561
    %1933 = vmatpush.bf16.msra.mxu0 %v1557
    %1934 = vmatpush.bf16.msra.mxu0 %v1553
    %1935 = vmatpush.bf16.msra.mxu0 %v1549
    %1936 = vmatmul.bf16.gmra.mxu0 %v290
    %v1937 = vpop.f32.mrf.mxu0
    %v1938 = vadd.f32 %v1925, %v1937
    %v1939 = vpop.f32.mrf.mxu0
    %1940 = vdwg.mxu0
    %1941 = vmatpush.bf16.msra.mxu0 %v1354
    %1942 = vmatpush.bf16.msra.mxu0 %v1350
    %1943 = vmatpush.bf16.msra.mxu0 %v1346
    %1944 = vmatpush.bf16.msra.mxu0 %v1342
    %1945 = vmatpush.bf16.msra.mxu0 %v1338
    %1946 = vmatpush.bf16.msra.mxu0 %v1334
    %1947 = vmatpush.bf16.msra.mxu0 %v1330
    %1948 = vmatpush.bf16.msra.mxu0 %v1326
    %1949 = vmatmul.bf16.gmra.mxu0 %v283
    %v1950 = vpop.f32.mrf.mxu0
    %v1951 = vadd.f32 %v550, %v1950
    %v1952 = vpop.f32.mrf.mxu0
    %1953 = vdwg.mxu0
    %1954 = vmatpush.bf16.msra.mxu0 %v1386
    %1955 = vmatpush.bf16.msra.mxu0 %v1382
    %1956 = vmatpush.bf16.msra.mxu0 %v1378
    %1957 = vmatpush.bf16.msra.mxu0 %v1374
    %1958 = vmatpush.bf16.msra.mxu0 %v1370
    %1959 = vmatpush.bf16.msra.mxu0 %v1366
    %1960 = vmatpush.bf16.msra.mxu0 %v1362
    %1961 = vmatpush.bf16.msra.mxu0 %v1358
    %1962 = vmatmul.bf16.gmra.mxu0 %v284
    %v1963 = vpop.f32.mrf.mxu0
    %v1964 = vadd.f32 %v1951, %v1963
    %v1965 = vpop.f32.mrf.mxu0
    %1966 = vdwg.mxu0
    %1967 = vmatpush.bf16.msra.mxu0 %v1418
    %1968 = vmatpush.bf16.msra.mxu0 %v1414
    %1969 = vmatpush.bf16.msra.mxu0 %v1410
    %1970 = vmatpush.bf16.msra.mxu0 %v1406
    %1971 = vmatpush.bf16.msra.mxu0 %v1402
    %1972 = vmatpush.bf16.msra.mxu0 %v1398
    %1973 = vmatpush.bf16.msra.mxu0 %v1394
    %1974 = vmatpush.bf16.msra.mxu0 %v1390
    %1975 = vmatmul.bf16.gmra.mxu0 %v285
    %v1976 = vpop.f32.mrf.mxu0
    %v1977 = vadd.f32 %v1964, %v1976
    %v1978 = vpop.f32.mrf.mxu0
    %1979 = vdwg.mxu0
    %1980 = vmatpush.bf16.msra.mxu0 %v1450
    %1981 = vmatpush.bf16.msra.mxu0 %v1446
    %1982 = vmatpush.bf16.msra.mxu0 %v1442
    %1983 = vmatpush.bf16.msra.mxu0 %v1438
    %1984 = vmatpush.bf16.msra.mxu0 %v1434
    %1985 = vmatpush.bf16.msra.mxu0 %v1430
    %1986 = vmatpush.bf16.msra.mxu0 %v1426
    %1987 = vmatpush.bf16.msra.mxu0 %v1422
    %1988 = vmatmul.bf16.gmra.mxu0 %v286
    %v1989 = vpop.f32.mrf.mxu0
    %v1990 = vadd.f32 %v1977, %v1989
    %v1991 = vpop.f32.mrf.mxu0
    %1992 = vdwg.mxu0
    %1993 = vmatpush.bf16.msra.mxu0 %v1482
    %1994 = vmatpush.bf16.msra.mxu0 %v1478
    %1995 = vmatpush.bf16.msra.mxu0 %v1474
    %1996 = vmatpush.bf16.msra.mxu0 %v1470
    %1997 = vmatpush.bf16.msra.mxu0 %v1466
    %1998 = vmatpush.bf16.msra.mxu0 %v1462
    %1999 = vmatpush.bf16.msra.mxu0 %v1458
    %2000 = vmatpush.bf16.msra.mxu0 %v1454
    %2001 = vmatmul.bf16.gmra.mxu0 %v287
    %v2002 = vpop.f32.mrf.mxu0
    %v2003 = vadd.f32 %v1990, %v2002
    %v2004 = vpop.f32.mrf.mxu0
    %2005 = vdwg.mxu0
    %2006 = vmatpush.bf16.msra.mxu0 %v1514
    %2007 = vmatpush.bf16.msra.mxu0 %v1510
    %2008 = vmatpush.bf16.msra.mxu0 %v1506
    %2009 = vmatpush.bf16.msra.mxu0 %v1502
    %2010 = vmatpush.bf16.msra.mxu0 %v1498
    %2011 = vmatpush.bf16.msra.mxu0 %v1494
    %2012 = vmatpush.bf16.msra.mxu0 %v1490
    %2013 = vmatpush.bf16.msra.mxu0 %v1486
    %2014 = vmatmul.bf16.gmra.mxu0 %v288
    %v2015 = vpop.f32.mrf.mxu0
    %v2016 = vadd.f32 %v2003, %v2015
    %v2017 = vpop.f32.mrf.mxu0
    %2018 = vdwg.mxu0
    %2019 = vmatpush.bf16.msra.mxu0 %v1546
    %2020 = vmatpush.bf16.msra.mxu0 %v1542
    %2021 = vmatpush.bf16.msra.mxu0 %v1538
    %2022 = vmatpush.bf16.msra.mxu0 %v1534
    %2023 = vmatpush.bf16.msra.mxu0 %v1530
    %2024 = vmatpush.bf16.msra.mxu0 %v1526
    %2025 = vmatpush.bf16.msra.mxu0 %v1522
    %2026 = vmatpush.bf16.msra.mxu0 %v1518
    %2027 = vmatmul.bf16.gmra.mxu0 %v289
    %v2028 = vpop.f32.mrf.mxu0
    %v2029 = vadd.f32 %v2016, %v2028
    %v2030 = vpop.f32.mrf.mxu0
    %2031 = vdwg.mxu0
    %2032 = vmatpush.bf16.msra.mxu0 %v1578
    %2033 = vmatpush.bf16.msra.mxu0 %v1574
    %2034 = vmatpush.bf16.msra.mxu0 %v1570
    %2035 = vmatpush.bf16.msra.mxu0 %v1566
    %2036 = vmatpush.bf16.msra.mxu0 %v1562
    %2037 = vmatpush.bf16.msra.mxu0 %v1558
    %2038 = vmatpush.bf16.msra.mxu0 %v1554
    %2039 = vmatpush.bf16.msra.mxu0 %v1550
    %2040 = vmatmul.bf16.gmra.mxu0 %v290
    %v2041 = vpop.f32.mrf.mxu0
    %v2042 = vadd.f32 %v2029, %v2041
    %v2043 = vpop.f32.mrf.mxu0
    %2044 = vdwg.mxu0
    %2045 = vmatpush.bf16.msra.mxu0 %v1355
    %2046 = vmatpush.bf16.msra.mxu0 %v1351
    %2047 = vmatpush.bf16.msra.mxu0 %v1347
    %2048 = vmatpush.bf16.msra.mxu0 %v1343
    %2049 = vmatpush.bf16.msra.mxu0 %v1339
    %2050 = vmatpush.bf16.msra.mxu0 %v1335
    %2051 = vmatpush.bf16.msra.mxu0 %v1331
    %2052 = vmatpush.bf16.msra.mxu0 %v1327
    %2053 = vmatmul.bf16.gmra.mxu0 %v283
    %v2054 = vpop.f32.mrf.mxu0
    %v2055 = vadd.f32 %v551, %v2054
    %v2056 = vpop.f32.mrf.mxu0
    %2057 = vdwg.mxu0
    %2058 = vmatpush.bf16.msra.mxu0 %v1387
    %2059 = vmatpush.bf16.msra.mxu0 %v1383
    %2060 = vmatpush.bf16.msra.mxu0 %v1379
    %2061 = vmatpush.bf16.msra.mxu0 %v1375
    %2062 = vmatpush.bf16.msra.mxu0 %v1371
    %2063 = vmatpush.bf16.msra.mxu0 %v1367
    %2064 = vmatpush.bf16.msra.mxu0 %v1363
    %2065 = vmatpush.bf16.msra.mxu0 %v1359
    %2066 = vmatmul.bf16.gmra.mxu0 %v284
    %v2067 = vpop.f32.mrf.mxu0
    %v2068 = vadd.f32 %v2055, %v2067
    %v2069 = vpop.f32.mrf.mxu0
    %2070 = vdwg.mxu0
    %2071 = vmatpush.bf16.msra.mxu0 %v1419
    %2072 = vmatpush.bf16.msra.mxu0 %v1415
    %2073 = vmatpush.bf16.msra.mxu0 %v1411
    %2074 = vmatpush.bf16.msra.mxu0 %v1407
    %2075 = vmatpush.bf16.msra.mxu0 %v1403
    %2076 = vmatpush.bf16.msra.mxu0 %v1399
    %2077 = vmatpush.bf16.msra.mxu0 %v1395
    %2078 = vmatpush.bf16.msra.mxu0 %v1391
    %2079 = vmatmul.bf16.gmra.mxu0 %v285
    %v2080 = vpop.f32.mrf.mxu0
    %v2081 = vadd.f32 %v2068, %v2080
    %v2082 = vpop.f32.mrf.mxu0
    %2083 = vdwg.mxu0
    %2084 = vmatpush.bf16.msra.mxu0 %v1451
    %2085 = vmatpush.bf16.msra.mxu0 %v1447
    %2086 = vmatpush.bf16.msra.mxu0 %v1443
    %2087 = vmatpush.bf16.msra.mxu0 %v1439
    %2088 = vmatpush.bf16.msra.mxu0 %v1435
    %2089 = vmatpush.bf16.msra.mxu0 %v1431
    %2090 = vmatpush.bf16.msra.mxu0 %v1427
    %2091 = vmatpush.bf16.msra.mxu0 %v1423
    %2092 = vmatmul.bf16.gmra.mxu0 %v286
    %v2093 = vpop.f32.mrf.mxu0
    %v2094 = vadd.f32 %v2081, %v2093
    %v2095 = vpop.f32.mrf.mxu0
    %2096 = vdwg.mxu0
    %2097 = vmatpush.bf16.msra.mxu0 %v1483
    %2098 = vmatpush.bf16.msra.mxu0 %v1479
    %2099 = vmatpush.bf16.msra.mxu0 %v1475
    %2100 = vmatpush.bf16.msra.mxu0 %v1471
    %2101 = vmatpush.bf16.msra.mxu0 %v1467
    %2102 = vmatpush.bf16.msra.mxu0 %v1463
    %2103 = vmatpush.bf16.msra.mxu0 %v1459
    %2104 = vmatpush.bf16.msra.mxu0 %v1455
    %2105 = vmatmul.bf16.gmra.mxu0 %v287
    %v2106 = vpop.f32.mrf.mxu0
    %v2107 = vadd.f32 %v2094, %v2106
    %v2108 = vpop.f32.mrf.mxu0
    %2109 = vdwg.mxu0
    %2110 = vmatpush.bf16.msra.mxu0 %v1515
    %2111 = vmatpush.bf16.msra.mxu0 %v1511
    %2112 = vmatpush.bf16.msra.mxu0 %v1507
    %2113 = vmatpush.bf16.msra.mxu0 %v1503
    %2114 = vmatpush.bf16.msra.mxu0 %v1499
    %2115 = vmatpush.bf16.msra.mxu0 %v1495
    %2116 = vmatpush.bf16.msra.mxu0 %v1491
    %2117 = vmatpush.bf16.msra.mxu0 %v1487
    %2118 = vmatmul.bf16.gmra.mxu0 %v288
    %v2119 = vpop.f32.mrf.mxu0
    %v2120 = vadd.f32 %v2107, %v2119
    %v2121 = vpop.f32.mrf.mxu0
    %2122 = vdwg.mxu0
    %2123 = vmatpush.bf16.msra.mxu0 %v1547
    %2124 = vmatpush.bf16.msra.mxu0 %v1543
    %2125 = vmatpush.bf16.msra.mxu0 %v1539
    %2126 = vmatpush.bf16.msra.mxu0 %v1535
    %2127 = vmatpush.bf16.msra.mxu0 %v1531
    %2128 = vmatpush.bf16.msra.mxu0 %v1527
    %2129 = vmatpush.bf16.msra.mxu0 %v1523
    %2130 = vmatpush.bf16.msra.mxu0 %v1519
    %2131 = vmatmul.bf16.gmra.mxu0 %v289
    %v2132 = vpop.f32.mrf.mxu0
    %v2133 = vadd.f32 %v2120, %v2132
    %v2134 = vpop.f32.mrf.mxu0
    %2135 = vdwg.mxu0
    %2136 = vmatpush.bf16.msra.mxu0 %v1579
    %2137 = vmatpush.bf16.msra.mxu0 %v1575
    %2138 = vmatpush.bf16.msra.mxu0 %v1571
    %2139 = vmatpush.bf16.msra.mxu0 %v1567
    %2140 = vmatpush.bf16.msra.mxu0 %v1563
    %2141 = vmatpush.bf16.msra.mxu0 %v1559
    %2142 = vmatpush.bf16.msra.mxu0 %v1555
    %2143 = vmatpush.bf16.msra.mxu0 %v1551
    %2144 = vmatmul.bf16.gmra.mxu0 %v290
    %v2145 = vpop.f32.mrf.mxu0
    %v2146 = vadd.f32 %v2133, %v2145
    %v2147 = vpop.f32.mrf.mxu0
    %2148 = vdwg.mxu0
    %2149 = vmatpush.bf16.msra.mxu0 %v1356
    %2150 = vmatpush.bf16.msra.mxu0 %v1352
    %2151 = vmatpush.bf16.msra.mxu0 %v1348
    %2152 = vmatpush.bf16.msra.mxu0 %v1344
    %2153 = vmatpush.bf16.msra.mxu0 %v1340
    %2154 = vmatpush.bf16.msra.mxu0 %v1336
    %2155 = vmatpush.bf16.msra.mxu0 %v1332
    %2156 = vmatpush.bf16.msra.mxu0 %v1328
    %2157 = vmatmul.bf16.gmra.mxu0 %v283
    %v2158 = vpop.f32.mrf.mxu0
    %v2159 = vadd.f32 %v552, %v2158
    %v2160 = vpop.f32.mrf.mxu0
    %2161 = vdwg.mxu0
    %2162 = vmatpush.bf16.msra.mxu0 %v1388
    %2163 = vmatpush.bf16.msra.mxu0 %v1384
    %2164 = vmatpush.bf16.msra.mxu0 %v1380
    %2165 = vmatpush.bf16.msra.mxu0 %v1376
    %2166 = vmatpush.bf16.msra.mxu0 %v1372
    %2167 = vmatpush.bf16.msra.mxu0 %v1368
    %2168 = vmatpush.bf16.msra.mxu0 %v1364
    %2169 = vmatpush.bf16.msra.mxu0 %v1360
    %2170 = vmatmul.bf16.gmra.mxu0 %v284
    %v2171 = vpop.f32.mrf.mxu0
    %v2172 = vadd.f32 %v2159, %v2171
    %v2173 = vpop.f32.mrf.mxu0
    %2174 = vdwg.mxu0
    %2175 = vmatpush.bf16.msra.mxu0 %v1420
    %2176 = vmatpush.bf16.msra.mxu0 %v1416
    %2177 = vmatpush.bf16.msra.mxu0 %v1412
    %2178 = vmatpush.bf16.msra.mxu0 %v1408
    %2179 = vmatpush.bf16.msra.mxu0 %v1404
    %2180 = vmatpush.bf16.msra.mxu0 %v1400
    %2181 = vmatpush.bf16.msra.mxu0 %v1396
    %2182 = vmatpush.bf16.msra.mxu0 %v1392
    %2183 = vmatmul.bf16.gmra.mxu0 %v285
    %v2184 = vpop.f32.mrf.mxu0
    %v2185 = vadd.f32 %v2172, %v2184
    %v2186 = vpop.f32.mrf.mxu0
    %2187 = vdwg.mxu0
    %2188 = vmatpush.bf16.msra.mxu0 %v1452
    %2189 = vmatpush.bf16.msra.mxu0 %v1448
    %2190 = vmatpush.bf16.msra.mxu0 %v1444
    %2191 = vmatpush.bf16.msra.mxu0 %v1440
    %2192 = vmatpush.bf16.msra.mxu0 %v1436
    %2193 = vmatpush.bf16.msra.mxu0 %v1432
    %2194 = vmatpush.bf16.msra.mxu0 %v1428
    %2195 = vmatpush.bf16.msra.mxu0 %v1424
    %2196 = vmatmul.bf16.gmra.mxu0 %v286
    %v2197 = vpop.f32.mrf.mxu0
    %v2198 = vadd.f32 %v2185, %v2197
    %v2199 = vpop.f32.mrf.mxu0
    %2200 = vdwg.mxu0
    %2201 = vmatpush.bf16.msra.mxu0 %v1484
    %2202 = vmatpush.bf16.msra.mxu0 %v1480
    %2203 = vmatpush.bf16.msra.mxu0 %v1476
    %2204 = vmatpush.bf16.msra.mxu0 %v1472
    %2205 = vmatpush.bf16.msra.mxu0 %v1468
    %2206 = vmatpush.bf16.msra.mxu0 %v1464
    %2207 = vmatpush.bf16.msra.mxu0 %v1460
    %2208 = vmatpush.bf16.msra.mxu0 %v1456
    %2209 = vmatmul.bf16.gmra.mxu0 %v287
    %v2210 = vpop.f32.mrf.mxu0
    %v2211 = vadd.f32 %v2198, %v2210
    %v2212 = vpop.f32.mrf.mxu0
    %2213 = vdwg.mxu0
    %2214 = vmatpush.bf16.msra.mxu0 %v1516
    %2215 = vmatpush.bf16.msra.mxu0 %v1512
    %2216 = vmatpush.bf16.msra.mxu0 %v1508
    %2217 = vmatpush.bf16.msra.mxu0 %v1504
    %2218 = vmatpush.bf16.msra.mxu0 %v1500
    %2219 = vmatpush.bf16.msra.mxu0 %v1496
    %2220 = vmatpush.bf16.msra.mxu0 %v1492
    %2221 = vmatpush.bf16.msra.mxu0 %v1488
    %2222 = vmatmul.bf16.gmra.mxu0 %v288
    %v2223 = vpop.f32.mrf.mxu0
    %v2224 = vadd.f32 %v2211, %v2223
    %v2225 = vpop.f32.mrf.mxu0
    %2226 = vdwg.mxu0
    %2227 = vmatpush.bf16.msra.mxu0 %v1548
    %2228 = vmatpush.bf16.msra.mxu0 %v1544
    %2229 = vmatpush.bf16.msra.mxu0 %v1540
    %2230 = vmatpush.bf16.msra.mxu0 %v1536
    %2231 = vmatpush.bf16.msra.mxu0 %v1532
    %2232 = vmatpush.bf16.msra.mxu0 %v1528
    %2233 = vmatpush.bf16.msra.mxu0 %v1524
    %2234 = vmatpush.bf16.msra.mxu0 %v1520
    %2235 = vmatmul.bf16.gmra.mxu0 %v289
    %v2236 = vpop.f32.mrf.mxu0
    %v2237 = vadd.f32 %v2224, %v2236
    %v2238 = vpop.f32.mrf.mxu0
    %2239 = vdwg.mxu0
    %2240 = vmatpush.bf16.msra.mxu0 %v1580
    %2241 = vmatpush.bf16.msra.mxu0 %v1576
    %2242 = vmatpush.bf16.msra.mxu0 %v1572
    %2243 = vmatpush.bf16.msra.mxu0 %v1568
    %2244 = vmatpush.bf16.msra.mxu0 %v1564
    %2245 = vmatpush.bf16.msra.mxu0 %v1560
    %2246 = vmatpush.bf16.msra.mxu0 %v1556
    %2247 = vmatpush.bf16.msra.mxu0 %v1552
    %2248 = vmatmul.bf16.gmra.mxu0 %v290
    %v2249 = vpop.f32.mrf.mxu0
    %v2250 = vadd.f32 %v2237, %v2249
    %v2251 = vpop.f32.mrf.mxu0
    %2252 = vdwg.mxu0
    %v2253 = vmax.f32 %v1938, 0.0
    %v2254 = vmax.f32 %v2042, 0.0
    %v2255 = vmax.f32 %v2146, 0.0
    %v2256 = vmax.f32 %v2250, 0.0
    %v2257 = vld [vmem:[#allocation10] sm:$0xf]
    %v2258 = vunpack.c.l.bf16 %v2257
    %v2260 = vperm.slane %v2258, 0
    %v2261 = vperm.slane %v2258, 2
    %v2262 = vperm.slane %v2258, 4
    %v2263 = vperm.slane %v2258, 6
    %v2268 = vperm.slane %v2260, 0
    %v2269 = vperm.slane %v2261, 0
    %v2270 = vperm.slane %v2262, 0
    %v2271 = vperm.slane %v2263, 0
    %v2272 = vmul.f32 %v2253, %v2268
    %v2273 = vmul.f32 %v2254, %v2269
    %v2274 = vmul.f32 %v2255, %v2270
    %v2275 = vmul.f32 %v2256, %v2271
    %v2276 = vadd.f32 %v2272, %v2273
    %v2277 = vadd.f32 %v2276, %v2274
    %v2278 = vadd.f32 %v2277, %v2275
    %v2279 = vsel %vm146, %v2278, 0.0
    %2280 = vadd.xlane.f32.xlu0 %v2279
    %v2281 = vpop.xlane.xlu0 %2280
    %s2282 = sld [smem:[#allocation2]]
    %v2283 = vstv %s2282
    %v2284 = vadd.f32 %v2281, %v2283
    %vm2285 = vcmask 3072
    %2286 = vst.msk [vmem:[%s7] sm:$0xf] %vm2285, %v2284
    // Predicated region
    $region50: #{tpu_custom_call.1} parent=1 // pred_check
      _
    $region51: #{tpu_custom_call.1} parent=1 // pred_check_branch
      %2288 = sbr.rel (0) target = $region53
    $region52: #{tpu_custom_call.1} parent=1 // pred_region
      _
    $region53: #{tpu_custom_call.1} parent=1 // pred_fallthru
      _
    // Predicated region
    $region54: #{tpu_custom_call.1} parent=1 // pred_check
      _
    $region55: #{tpu_custom_call.1} parent=1 // pred_check_branch
      %2290 = sbr.rel (0) target = $region57
    $region56: #{tpu_custom_call.1} parent=1 // pred_region
      _
    $region57: #{tpu_custom_call.1} parent=1 // pred_fallthru
      _
    %2291 = vsyncpa [#allocation4], 1
    %2292 = vsyncpa [#allocation6], 1
    %2293 = vsyncpa [#allocation9], 1

</llo_original>
